<compile_context>
chip_gen: v6e
topology: v6e:2x2x1
jax: 0.10.0
libtpu: 0.0.40
codegen_flags: <defaults>
</compile_context>

<pallas_src>
import functools

import jax
import jax.numpy as jnp
from jax import lax
from jax.experimental import pallas as pl
from jax.experimental.pallas import tpu as pltpu


def _hybrid_kernel(x_ref, wih_ref, bih_ref, whh_f_ref, whh_b_ref,
                   wf_ref, wb_ref, bh_ref,
                   out_ref,
                   xg_ref, hf_ref, hb_ref,
                   *, seq_len, batch):
    S, B = seq_len, batch
    H = whh_f_ref.shape[0]
    G = 4 * H  # gates per direction

    # ---- (1) batched input projection, both directions, one MXU call --------
    # xg[:, :G]  = x @ wih_f + (b_ih_f + b_hh_f)
    # xg[:, G:]  = x @ wih_b + (b_ih_b + b_hh_b)
    xg_ref[...] = (jnp.dot(x_ref[...], wih_ref[...],
                           preferred_element_type=jnp.float32)
                   + bih_ref[...])

    whh_f = whh_f_ref[...]
    whh_b = whh_b_ref[...]

    def gates_to_hc(g, c):
        # PyTorch gate order: i, f, g, o
        i = jax.nn.sigmoid(g[:, 0 * H:1 * H])
        f = jax.nn.sigmoid(g[:, 1 * H:2 * H])
        gg = jnp.tanh(g[:, 2 * H:3 * H])
        o = jax.nn.sigmoid(g[:, 3 * H:4 * H])
        c_new = f * c + i * gg
        h_new = o * jnp.tanh(c_new)
        return h_new, c_new

    hf = jnp.zeros((B, H), jnp.float32)
    cf = jnp.zeros((B, H), jnp.float32)
    hb = jnp.zeros((B, H), jnp.float32)
    cb = jnp.zeros((B, H), jnp.float32)

    # ---- (2) interleaved bidirectional recurrence, fully unrolled ------------
    # Forward chain processes time t; backward chain processes time S-1-t.
    # The two chains are independent -> their MXU/EUP/VPU ops can co-issue.
    for t in range(S):
        tb = S - 1 - t
        gf = (jnp.dot(hf, whh_f, preferred_element_type=jnp.float32)
              + xg_ref[t * B:(t + 1) * B, :G])
        gb = (jnp.dot(hb, whh_b, preferred_element_type=jnp.float32)
              + xg_ref[tb * B:(tb + 1) * B, G:])
        hf, cf = gates_to_hc(gf, cf)
        hb, cb = gates_to_hc(gb, cb)
        hf_ref[t * B:(t + 1) * B, :] = hf    # forward hidden at time t
        hb_ref[tb * B:(tb + 1) * B, :] = hb  # backward hidden at time tb

    # ---- (3) fused, batched head over all timesteps (single slab store) -----
    # out = fwd @ (w1[:H] @ w2) + bwd @ (w1[H:] @ w2) + (b1 @ w2 + b2)
    out_ref[...] = (jnp.dot(hf_ref[...], wf_ref[...],
                            preferred_element_type=jnp.float32)
                    + jnp.dot(hb_ref[...], wb_ref[...],
                              preferred_element_type=jnp.float32)
                    + bh_ref[...])
    # dropout(p=0.2) == identity in eval mode.


def hybrid_forward(x, params):
    S, B, E = x.shape
    H = params["whh_f"].shape[0]
    L = params["w2"].shape[1]

    # -------- offline (wrapper-side) fusions; all exact ----------------------
    # Concatenate the per-direction input projections into one (E, 8H) matmul.
    wih_cat = jnp.concatenate([params["wih_f"], params["wih_b"]], axis=1)  # (E, 8H)
    b_cat = jnp.concatenate([params["b_f"], params["b_b"]], axis=1)        # (1, 8H)
    # Fuse hidden2label (w1,b1) and hybridLayer (w2,b2); split by direction so
    # the kernel never has to concatenate [fwd | bwd] along the lane axis.
    w_head_f = params["w1"][:H] @ params["w2"]                             # (H, L)
    w_head_b = params["w1"][H:] @ params["w2"]                             # (H, L)
    b_head = params["b1"] @ params["w2"] + params["b2"]                    # (1, L)

    x2d = x.reshape(S * B, E)  # time-major rows: row t*B + b  <->  x[t, b]

    kernel = functools.partial(_hybrid_kernel, seq_len=S, batch=B)

    out2d = pl.pallas_call(
        kernel,
        out_shape=jax.ShapeDtypeStruct((S * B, L), jnp.float32),
        scratch_shapes=[
            pltpu.VMEM((S * B, 8 * H), jnp.float32),  # precomputed input gates
            pltpu.VMEM((S * B, H), jnp.float32),      # fwd hidden, time-major
            pltpu.VMEM((S * B, H), jnp.float32),      # bwd hidden, time-major
        ],
    )(x2d, wih_cat, b_cat, params["whh_f"], params["whh_b"],
      w_head_f, w_head_b, b_head)

    return out2d.reshape(S, B, L)


def make_params(key, embedding_dim, hidden_dim, extracted_feature_size, label_size):
    """Deterministic init mirroring PyTorch's uniform(-1/sqrt(fan), 1/sqrt(fan))."""
    E, H, F, L = embedding_dim, hidden_dim, extracted_feature_size, label_size
    ks = jax.random.split(key, 16)
    k_lstm = 1.0 / jnp.sqrt(H)

    def u(k, shape, bound):
        return jax.random.uniform(k, shape, jnp.float32, -bound, bound)

    params = {
        # weights stored pre-transposed: x @ W  (PyTorch stores (4H, E) / (4H, H))
        "wih_f": u(ks[0], (E, 4 * H), k_lstm),
        "whh_f": u(ks[1], (H, 4 * H), k_lstm),
        "b_f":   u(ks[2], (1, 4 * H), k_lstm) + u(ks[3], (1, 4 * H), k_lstm),  # b_ih + b_hh
        "wih_b": u(ks[4], (E, 4 * H), k_lstm),
        "whh_b": u(ks[5], (H, 4 * H), k_lstm),
        "b_b":   u(ks[6], (1, 4 * H), k_lstm) + u(ks[7], (1, 4 * H), k_lstm),
        "w1":    u(ks[8], (2 * H, F), 1.0 / jnp.sqrt(2 * H)),
        "b1":    u(ks[9], (1, F), 1.0 / jnp.sqrt(2 * H)),
        "w2":    u(ks[10], (F, L), 1.0 / jnp.sqrt(F)),
        "b2":    u(ks[11], (1, L), 1.0 / jnp.sqrt(F)),
    }
    return params


def hybrid_reference(x, params):
    """Pure-JAX reference of the same forward pass (unfused, for correctness)."""
    S, B, E = x.shape
    H = params["whh_f"].shape[0]

    def step(wih, whh, b):
        def f(carry, xt):
            h, c = carry
            g = xt @ wih + h @ whh + b
            i = jax.nn.sigmoid(g[:, 0 * H:1 * H])
            fg = jax.nn.sigmoid(g[:, 1 * H:2 * H])
            gg = jnp.tanh(g[:, 2 * H:3 * H])
            o = jax.nn.sigmoid(g[:, 3 * H:4 * H])
            c = fg * c + i * gg
            h = o * jnp.tanh(c)
            return (h, c), h
        return f

    h0 = jnp.zeros((B, H), jnp.float32)
    c0 = jnp.zeros((B, H), jnp.float32)
    _, out_f = lax.scan(step(params["wih_f"], params["whh_f"], params["b_f"]), (h0, c0), x)
    _, out_b = lax.scan(step(params["wih_b"], params["whh_b"], params["b_b"]), (h0, c0), x[::-1])
    out_b = out_b[::-1]
    lstm_out = jnp.concatenate([out_f, out_b], axis=-1)          # (S, B, 2H)
    hid = lstm_out @ params["w1"] + params["b1"]                 # (S, B, F)
    return hid @ params["w2"] + params["b2"]                     # (S, B, L)


if __name__ == "__main__":
    # Module hyper-params (small, TPU-friendly):
    SEQ_LEN, BATCH = 8, 8
    EMBEDDING_DIM, HIDDEN_DIM = 32, 32
    EXTRACTED_FEATURE_SIZE, LABEL_SIZE = 16, 4

    key = jax.random.PRNGKey(0)
    k_x, k_p = jax.random.split(key)

    # x: (seq_len, batch, embedding_dim) — PyTorch nn.LSTM default layout.
    x = jax.random.normal(k_x, (SEQ_LEN, BATCH, EMBEDDING_DIM), jnp.float32)
    params = make_params(k_p, EMBEDDING_DIM, HIDDEN_DIM, EXTRACTED_FEATURE_SIZE, LABEL_SIZE)

    out = hybrid_forward(x, params)
    out = jax.block_until_ready(out)

    ref = jax.block_until_ready(hybrid_reference(x, params))
    assert out.shape == (SEQ_LEN, BATCH, LABEL_SIZE), out.shape
    assert jnp.allclose(out, ref, rtol=1e-4, atol=1e-4), float(jnp.max(jnp.abs(out - ref)))

    print("KERNEL_OK")
</pallas_src>

<mosaic_0001>
module attributes {stable_mosaic.version = 11 : i64} {
  func.func @_hybrid_kernel(%arg0: memref<64x32xf32, #tpu.memory_space<vmem>>, %arg1: memref<32x256xf32, #tpu.memory_space<vmem>>, %arg2: memref<1x256xf32, #tpu.memory_space<vmem>>, %arg3: memref<32x128xf32, #tpu.memory_space<vmem>>, %arg4: memref<32x128xf32, #tpu.memory_space<vmem>>, %arg5: memref<32x4xf32, #tpu.memory_space<vmem>>, %arg6: memref<32x4xf32, #tpu.memory_space<vmem>>, %arg7: memref<1x4xf32, #tpu.memory_space<vmem>>, %arg8: memref<64x4xf32, #tpu.memory_space<vmem>>, %arg9: memref<64x256xf32, #tpu.memory_space<vmem>>, %arg10: memref<64x32xf32, #tpu.memory_space<vmem>>, %arg11: memref<64x32xf32, #tpu.memory_space<vmem>>) attributes {dimension_semantics = [], scalar_prefetch = 0 : i64, scratch_operands = 3 : i64, tpu.core_type = #tpu.core_type<tc>} {
    %c0 = arith.constant 0 : index
    %c0_0 = arith.constant 0 : index
    %0 = vector.load %arg0[%c0, %c0_0] : memref<64x32xf32, #tpu.memory_space<vmem>>, vector<64x32xf32>
    %c0_1 = arith.constant 0 : index
    %c0_2 = arith.constant 0 : index
    %1 = vector.load %arg1[%c0_1, %c0_2] : memref<32x256xf32, #tpu.memory_space<vmem>>, vector<32x256xf32>
    %cst = arith.constant dense<0.000000e+00> : vector<64x256xf32>
    %2 = tpu.matmul %0, %1, %cst {dimension_numbers = #tpu.dot_dimension_numbers<[1], [0], [0], [1], [0, 0, 1, 1], [], []>} : vector<64x32xf32>, vector<32x256xf32>, vector<64x256xf32> -> vector<64x256xf32>
    %c0_3 = arith.constant 0 : index
    %c0_4 = arith.constant 0 : index
    %3 = vector.load %arg2[%c0_3, %c0_4] : memref<1x256xf32, #tpu.memory_space<vmem>>, vector<1x256xf32>
    %4 = vector.broadcast %3 : vector<1x256xf32> to vector<64x256xf32>
    %5 = arith.addf %2, %4 : vector<64x256xf32>
    %c0_5 = arith.constant 0 : index
    %c0_6 = arith.constant 0 : index
    %6 = vector.load %arg9[%c0_5, %c0_6] : memref<64x256xf32, #tpu.memory_space<vmem>>, vector<64x256xf32>
    tpu.vector_store %arg9[%c0_5, %c0_6], %5 {strides = array<i32>} : memref<64x256xf32, #tpu.memory_space<vmem>>, vector<64x256xf32>,
    %c0_7 = arith.constant 0 : index
    %c0_8 = arith.constant 0 : index
    %7 = vector.load %arg3[%c0_7, %c0_8] : memref<32x128xf32, #tpu.memory_space<vmem>>, vector<32x128xf32>
    %c0_9 = arith.constant 0 : index
    %c0_10 = arith.constant 0 : index
    %8 = vector.load %arg4[%c0_9, %c0_10] : memref<32x128xf32, #tpu.memory_space<vmem>>, vector<32x128xf32>
    %cst_11 = arith.constant 0.000000e+00 : f32
    %9 = vector.broadcast %cst_11 : f32 to vector<8x32xf32>
    %cst_12 = arith.constant 0.000000e+00 : f32
    %10 = vector.broadcast %cst_12 : f32 to vector<8x32xf32>
    %cst_13 = arith.constant 0.000000e+00 : f32
    %11 = vector.broadcast %cst_13 : f32 to vector<8x32xf32>
    %cst_14 = arith.constant 0.000000e+00 : f32
    %12 = vector.broadcast %cst_14 : f32 to vector<8x32xf32>
    %cst_15 = arith.constant dense<0.000000e+00> : vector<8x128xf32>
    %13 = tpu.matmul %9, %7, %cst_15 {dimension_numbers = #tpu.dot_dimension_numbers<[1], [0], [0], [1], [0, 0, 1, 1], [], []>} : vector<8x32xf32>, vector<32x128xf32>, vector<8x128xf32> -> vector<8x128xf32>
    %c0_16 = arith.constant 0 : index
    %c0_17 = arith.constant 0 : index
    %14 = vector.load %arg9[%c0_16, %c0_17] : memref<64x256xf32, #tpu.memory_space<vmem>>, vector<8x128xf32>
    %15 = arith.addf %13, %14 : vector<8x128xf32>
    %cst_18 = arith.constant dense<0.000000e+00> : vector<8x128xf32>
    %16 = tpu.matmul %11, %8, %cst_18 {dimension_numbers = #tpu.dot_dimension_numbers<[1], [0], [0], [1], [0, 0, 1, 1], [], []>} : vector<8x32xf32>, vector<32x128xf32>, vector<8x128xf32> -> vector<8x128xf32>
    %c56 = arith.constant 56 : index
    %c128 = arith.constant 128 : index
    %17 = vector.load %arg9[%c56, %c128] : memref<64x256xf32, #tpu.memory_space<vmem>>, vector<8x128xf32>
    %18 = arith.addf %16, %17 : vector<8x128xf32>
    %19 = vector.extract_strided_slice %15 {offsets = [0, 0], sizes = [8, 32], strides = [1, 1]} : vector<8x128xf32> to vector<8x32xf32>
    %20 = arith.negf %19 : vector<8x32xf32>
    %21 = math.exp %20 : vector<8x32xf32>
    %cst_19 = arith.constant 1.000000e+00 : f32
    %22 = vector.broadcast %cst_19 : f32 to vector<8x32xf32>
    %23 = arith.addf %22, %21 : vector<8x32xf32>
    %24 = arith.divf %22, %23 : vector<8x32xf32>
    %25 = vector.extract_strided_slice %15 {offsets = [0, 32], sizes = [8, 32], strides = [1, 1]} : vector<8x128xf32> to vector<8x32xf32>
    %26 = arith.negf %25 : vector<8x32xf32>
    %27 = math.exp %26 : vector<8x32xf32>
    %cst_20 = arith.constant 1.000000e+00 : f32
    %28 = vector.broadcast %cst_20 : f32 to vector<8x32xf32>
    %29 = arith.addf %28, %27 : vector<8x32xf32>
    %30 = arith.divf %28, %29 : vector<8x32xf32>
    %31 = vector.extract_strided_slice %15 {offsets = [0, 64], sizes = [8, 32], strides = [1, 1]} : vector<8x128xf32> to vector<8x32xf32>
    %32 = math.tanh %31 : vector<8x32xf32>
    %33 = vector.extract_strided_slice %15 {offsets = [0, 96], sizes = [8, 32], strides = [1, 1]} : vector<8x128xf32> to vector<8x32xf32>
    %34 = arith.negf %33 : vector<8x32xf32>
    %35 = math.exp %34 : vector<8x32xf32>
    %cst_21 = arith.constant 1.000000e+00 : f32
    %36 = vector.broadcast %cst_21 : f32 to vector<8x32xf32>
    %37 = arith.addf %36, %35 : vector<8x32xf32>
    %38 = arith.divf %36, %37 : vector<8x32xf32>
    %39 = arith.mulf %30, %10 : vector<8x32xf32>
    %40 = arith.mulf %24, %32 : vector<8x32xf32>
    %41 = arith.addf %39, %40 : vector<8x32xf32>
    %42 = math.tanh %41 : vector<8x32xf32>
    %43 = arith.mulf %38, %42 : vector<8x32xf32>
    %44 = vector.extract_strided_slice %18 {offsets = [0, 0], sizes = [8, 32], strides = [1, 1]} : vector<8x128xf32> to vector<8x32xf32>
    %45 = arith.negf %44 : vector<8x32xf32>
    %46 = math.exp %45 : vector<8x32xf32>
    %cst_22 = arith.constant 1.000000e+00 : f32
    %47 = vector.broadcast %cst_22 : f32 to vector<8x32xf32>
    %48 = arith.addf %47, %46 : vector<8x32xf32>
    %49 = arith.divf %47, %48 : vector<8x32xf32>
    %50 = vector.extract_strided_slice %18 {offsets = [0, 32], sizes = [8, 32], strides = [1, 1]} : vector<8x128xf32> to vector<8x32xf32>
    %51 = arith.negf %50 : vector<8x32xf32>
    %52 = math.exp %51 : vector<8x32xf32>
    %cst_23 = arith.constant 1.000000e+00 : f32
    %53 = vector.broadcast %cst_23 : f32 to vector<8x32xf32>
    %54 = arith.addf %53, %52 : vector<8x32xf32>
    %55 = arith.divf %53, %54 : vector<8x32xf32>
    %56 = vector.extract_strided_slice %18 {offsets = [0, 64], sizes = [8, 32], strides = [1, 1]} : vector<8x128xf32> to vector<8x32xf32>
    %57 = math.tanh %56 : vector<8x32xf32>
    %58 = vector.extract_strided_slice %18 {offsets = [0, 96], sizes = [8, 32], strides = [1, 1]} : vector<8x128xf32> to vector<8x32xf32>
    %59 = arith.negf %58 : vector<8x32xf32>
    %60 = math.exp %59 : vector<8x32xf32>
    %cst_24 = arith.constant 1.000000e+00 : f32
    %61 = vector.broadcast %cst_24 : f32 to vector<8x32xf32>
    %62 = arith.addf %61, %60 : vector<8x32xf32>
    %63 = arith.divf %61, %62 : vector<8x32xf32>
    %64 = arith.mulf %55, %12 : vector<8x32xf32>
    %65 = arith.mulf %49, %57 : vector<8x32xf32>
    %66 = arith.addf %64, %65 : vector<8x32xf32>
    %67 = math.tanh %66 : vector<8x32xf32>
    %68 = arith.mulf %63, %67 : vector<8x32xf32>
    %c0_25 = arith.constant 0 : index
    %c0_26 = arith.constant 0 : index
    %69 = vector.load %arg10[%c0_25, %c0_26] : memref<64x32xf32, #tpu.memory_space<vmem>>, vector<8x32xf32>
    tpu.vector_store %arg10[%c0_25, %c0_26], %43 {strides = array<i32>} : memref<64x32xf32, #tpu.memory_space<vmem>>, vector<8x32xf32>,
    %c56_27 = arith.constant 56 : index
    %c0_28 = arith.constant 0 : index
    %70 = vector.load %arg11[%c56_27, %c0_28] : memref<64x32xf32, #tpu.memory_space<vmem>>, vector<8x32xf32>
    tpu.vector_store %arg11[%c56_27, %c0_28], %68 {strides = array<i32>} : memref<64x32xf32, #tpu.memory_space<vmem>>, vector<8x32xf32>,
    %cst_29 = arith.constant dense<0.000000e+00> : vector<8x128xf32>
    %71 = tpu.matmul %43, %7, %cst_29 {dimension_numbers = #tpu.dot_dimension_numbers<[1], [0], [0], [1], [0, 0, 1, 1], [], []>} : vector<8x32xf32>, vector<32x128xf32>, vector<8x128xf32> -> vector<8x128xf32>
    %c8 = arith.constant 8 : index
    %c0_30 = arith.constant 0 : index
    %72 = vector.load %arg9[%c8, %c0_30] : memref<64x256xf32, #tpu.memory_space<vmem>>, vector<8x128xf32>
    %73 = arith.addf %71, %72 : vector<8x128xf32>
    %cst_31 = arith.constant dense<0.000000e+00> : vector<8x128xf32>
    %74 = tpu.matmul %68, %8, %cst_31 {dimension_numbers = #tpu.dot_dimension_numbers<[1], [0], [0], [1], [0, 0, 1, 1], [], []>} : vector<8x32xf32>, vector<32x128xf32>, vector<8x128xf32> -> vector<8x128xf32>
    %c48 = arith.constant 48 : index
    %c128_32 = arith.constant 128 : index
    %75 = vector.load %arg9[%c48, %c128_32] : memref<64x256xf32, #tpu.memory_space<vmem>>, vector<8x128xf32>
    %76 = arith.addf %74, %75 : vector<8x128xf32>
    %77 = vector.extract_strided_slice %73 {offsets = [0, 0], sizes = [8, 32], strides = [1, 1]} : vector<8x128xf32> to vector<8x32xf32>
    %78 = arith.negf %77 : vector<8x32xf32>
    %79 = math.exp %78 : vector<8x32xf32>
    %cst_33 = arith.constant 1.000000e+00 : f32
    %80 = vector.broadcast %cst_33 : f32 to vector<8x32xf32>
    %81 = arith.addf %80, %79 : vector<8x32xf32>
    %82 = arith.divf %80, %81 : vector<8x32xf32>
    %83 = vector.extract_strided_slice %73 {offsets = [0, 32], sizes = [8, 32], strides = [1, 1]} : vector<8x128xf32> to vector<8x32xf32>
    %84 = arith.negf %83 : vector<8x32xf32>
    %85 = math.exp %84 : vector<8x32xf32>
    %cst_34 = arith.constant 1.000000e+00 : f32
    %86 = vector.broadcast %cst_34 : f32 to vector<8x32xf32>
    %87 = arith.addf %86, %85 : vector<8x32xf32>
    %88 = arith.divf %86, %87 : vector<8x32xf32>
    %89 = vector.extract_strided_slice %73 {offsets = [0, 64], sizes = [8, 32], strides = [1, 1]} : vector<8x128xf32> to vector<8x32xf32>
    %90 = math.tanh %89 : vector<8x32xf32>
    %91 = vector.extract_strided_slice %73 {offsets = [0, 96], sizes = [8, 32], strides = [1, 1]} : vector<8x128xf32> to vector<8x32xf32>
    %92 = arith.negf %91 : vector<8x32xf32>
    %93 = math.exp %92 : vector<8x32xf32>
    %cst_35 = arith.constant 1.000000e+00 : f32
    %94 = vector.broadcast %cst_35 : f32 to vector<8x32xf32>
    %95 = arith.addf %94, %93 : vector<8x32xf32>
    %96 = arith.divf %94, %95 : vector<8x32xf32>
    %97 = arith.mulf %88, %41 : vector<8x32xf32>
    %98 = arith.mulf %82, %90 : vector<8x32xf32>
    %99 = arith.addf %97, %98 : vector<8x32xf32>
    %100 = math.tanh %99 : vector<8x32xf32>
    %101 = arith.mulf %96, %100 : vector<8x32xf32>
    %102 = vector.extract_strided_slice %76 {offsets = [0, 0], sizes = [8, 32], strides = [1, 1]} : vector<8x128xf32> to vector<8x32xf32>
    %103 = arith.negf %102 : vector<8x32xf32>
    %104 = math.exp %103 : vector<8x32xf32>
    %cst_36 = arith.constant 1.000000e+00 : f32
    %105 = vector.broadcast %cst_36 : f32 to vector<8x32xf32>
    %106 = arith.addf %105, %104 : vector<8x32xf32>
    %107 = arith.divf %105, %106 : vector<8x32xf32>
    %108 = vector.extract_strided_slice %76 {offsets = [0, 32], sizes = [8, 32], strides = [1, 1]} : vector<8x128xf32> to vector<8x32xf32>
    %109 = arith.negf %108 : vector<8x32xf32>
    %110 = math.exp %109 : vector<8x32xf32>
    %cst_37 = arith.constant 1.000000e+00 : f32
    %111 = vector.broadcast %cst_37 : f32 to vector<8x32xf32>
    %112 = arith.addf %111, %110 : vector<8x32xf32>
    %113 = arith.divf %111, %112 : vector<8x32xf32>
    %114 = vector.extract_strided_slice %76 {offsets = [0, 64], sizes = [8, 32], strides = [1, 1]} : vector<8x128xf32> to vector<8x32xf32>
    %115 = math.tanh %114 : vector<8x32xf32>
    %116 = vector.extract_strided_slice %76 {offsets = [0, 96], sizes = [8, 32], strides = [1, 1]} : vector<8x128xf32> to vector<8x32xf32>
    %117 = arith.negf %116 : vector<8x32xf32>
    %118 = math.exp %117 : vector<8x32xf32>
    %cst_38 = arith.constant 1.000000e+00 : f32
    %119 = vector.broadcast %cst_38 : f32 to vector<8x32xf32>
    %120 = arith.addf %119, %118 : vector<8x32xf32>
    %121 = arith.divf %119, %120 : vector<8x32xf32>
    %122 = arith.mulf %113, %66 : vector<8x32xf32>
    %123 = arith.mulf %107, %115 : vector<8x32xf32>
    %124 = arith.addf %122, %123 : vector<8x32xf32>
    %125 = math.tanh %124 : vector<8x32xf32>
    %126 = arith.mulf %121, %125 : vector<8x32xf32>
    %c8_39 = arith.constant 8 : index
    %c0_40 = arith.constant 0 : index
    %127 = vector.load %arg10[%c8_39, %c0_40] : memref<64x32xf32, #tpu.memory_space<vmem>>, vector<8x32xf32>
    tpu.vector_store %arg10[%c8_39, %c0_40], %101 {strides = array<i32>} : memref<64x32xf32, #tpu.memory_space<vmem>>, vector<8x32xf32>,
    %c48_41 = arith.constant 48 : index
    %c0_42 = arith.constant 0 : index
    %128 = vector.load %arg11[%c48_41, %c0_42] : memref<64x32xf32, #tpu.memory_space<vmem>>, vector<8x32xf32>
    tpu.vector_store %arg11[%c48_41, %c0_42], %126 {strides = array<i32>} : memref<64x32xf32, #tpu.memory_space<vmem>>, vector<8x32xf32>,
    %cst_43 = arith.constant dense<0.000000e+00> : vector<8x128xf32>
    %129 = tpu.matmul %101, %7, %cst_43 {dimension_numbers = #tpu.dot_dimension_numbers<[1], [0], [0], [1], [0, 0, 1, 1], [], []>} : vector<8x32xf32>, vector<32x128xf32>, vector<8x128xf32> -> vector<8x128xf32>
    %c16 = arith.constant 16 : index
    %c0_44 = arith.constant 0 : index
    %130 = vector.load %arg9[%c16, %c0_44] : memref<64x256xf32, #tpu.memory_space<vmem>>, vector<8x128xf32>
    %131 = arith.addf %129, %130 : vector<8x128xf32>
    %cst_45 = arith.constant dense<0.000000e+00> : vector<8x128xf32>
    %132 = tpu.matmul %126, %8, %cst_45 {dimension_numbers = #tpu.dot_dimension_numbers<[1], [0], [0], [1], [0, 0, 1, 1], [], []>} : vector<8x32xf32>, vector<32x128xf32>, vector<8x128xf32> -> vector<8x128xf32>
    %c40 = arith.constant 40 : index
    %c128_46 = arith.constant 128 : index
    %133 = vector.load %arg9[%c40, %c128_46] : memref<64x256xf32, #tpu.memory_space<vmem>>, vector<8x128xf32>
    %134 = arith.addf %132, %133 : vector<8x128xf32>
    %135 = vector.extract_strided_slice %131 {offsets = [0, 0], sizes = [8, 32], strides = [1, 1]} : vector<8x128xf32> to vector<8x32xf32>
    %136 = arith.negf %135 : vector<8x32xf32>
    %137 = math.exp %136 : vector<8x32xf32>
    %cst_47 = arith.constant 1.000000e+00 : f32
    %138 = vector.broadcast %cst_47 : f32 to vector<8x32xf32>
    %139 = arith.addf %138, %137 : vector<8x32xf32>
    %140 = arith.divf %138, %139 : vector<8x32xf32>
    %141 = vector.extract_strided_slice %131 {offsets = [0, 32], sizes = [8, 32], strides = [1, 1]} : vector<8x128xf32> to vector<8x32xf32>
    %142 = arith.negf %141 : vector<8x32xf32>
    %143 = math.exp %142 : vector<8x32xf32>
    %cst_48 = arith.constant 1.000000e+00 : f32
    %144 = vector.broadcast %cst_48 : f32 to vector<8x32xf32>
    %145 = arith.addf %144, %143 : vector<8x32xf32>
    %146 = arith.divf %144, %145 : vector<8x32xf32>
    %147 = vector.extract_strided_slice %131 {offsets = [0, 64], sizes = [8, 32], strides = [1, 1]} : vector<8x128xf32> to vector<8x32xf32>
    %148 = math.tanh %147 : vector<8x32xf32>
    %149 = vector.extract_strided_slice %131 {offsets = [0, 96], sizes = [8, 32], strides = [1, 1]} : vector<8x128xf32> to vector<8x32xf32>
    %150 = arith.negf %149 : vector<8x32xf32>
    %151 = math.exp %150 : vector<8x32xf32>
    %cst_49 = arith.constant 1.000000e+00 : f32
    %152 = vector.broadcast %cst_49 : f32 to vector<8x32xf32>
    %153 = arith.addf %152, %151 : vector<8x32xf32>
    %154 = arith.divf %152, %153 : vector<8x32xf32>
    %155 = arith.mulf %146, %99 : vector<8x32xf32>
    %156 = arith.mulf %140, %148 : vector<8x32xf32>
    %157 = arith.addf %155, %156 : vector<8x32xf32>
    %158 = math.tanh %157 : vector<8x32xf32>
    %159 = arith.mulf %154, %158 : vector<8x32xf32>
    %160 = vector.extract_strided_slice %134 {offsets = [0, 0], sizes = [8, 32], strides = [1, 1]} : vector<8x128xf32> to vector<8x32xf32>
    %161 = arith.negf %160 : vector<8x32xf32>
    %162 = math.exp %161 : vector<8x32xf32>
    %cst_50 = arith.constant 1.000000e+00 : f32
    %163 = vector.broadcast %cst_50 : f32 to vector<8x32xf32>
    %164 = arith.addf %163, %162 : vector<8x32xf32>
    %165 = arith.divf %163, %164 : vector<8x32xf32>
    %166 = vector.extract_strided_slice %134 {offsets = [0, 32], sizes = [8, 32], strides = [1, 1]} : vector<8x128xf32> to vector<8x32xf32>
    %167 = arith.negf %166 : vector<8x32xf32>
    %168 = math.exp %167 : vector<8x32xf32>
    %cst_51 = arith.constant 1.000000e+00 : f32
    %169 = vector.broadcast %cst_51 : f32 to vector<8x32xf32>
    %170 = arith.addf %169, %168 : vector<8x32xf32>
    %171 = arith.divf %169, %170 : vector<8x32xf32>
    %172 = vector.extract_strided_slice %134 {offsets = [0, 64], sizes = [8, 32], strides = [1, 1]} : vector<8x128xf32> to vector<8x32xf32>
    %173 = math.tanh %172 : vector<8x32xf32>
    %174 = vector.extract_strided_slice %134 {offsets = [0, 96], sizes = [8, 32], strides = [1, 1]} : vector<8x128xf32> to vector<8x32xf32>
    %175 = arith.negf %174 : vector<8x32xf32>
    %176 = math.exp %175 : vector<8x32xf32>
    %cst_52 = arith.constant 1.000000e+00 : f32
    %177 = vector.broadcast %cst_52 : f32 to vector<8x32xf32>
    %178 = arith.addf %177, %176 : vector<8x32xf32>
    %179 = arith.divf %177, %178 : vector<8x32xf32>
    %180 = arith.mulf %171, %124 : vector<8x32xf32>
    %181 = arith.mulf %165, %173 : vector<8x32xf32>
    %182 = arith.addf %180, %181 : vector<8x32xf32>
    %183 = math.tanh %182 : vector<8x32xf32>
    %184 = arith.mulf %179, %183 : vector<8x32xf32>
    %c16_53 = arith.constant 16 : index
    %c0_54 = arith.constant 0 : index
    %185 = vector.load %arg10[%c16_53, %c0_54] : memref<64x32xf32, #tpu.memory_space<vmem>>, vector<8x32xf32>
    tpu.vector_store %arg10[%c16_53, %c0_54], %159 {strides = array<i32>} : memref<64x32xf32, #tpu.memory_space<vmem>>, vector<8x32xf32>,
    %c40_55 = arith.constant 40 : index
    %c0_56 = arith.constant 0 : index
    %186 = vector.load %arg11[%c40_55, %c0_56] : memref<64x32xf32, #tpu.memory_space<vmem>>, vector<8x32xf32>
    tpu.vector_store %arg11[%c40_55, %c0_56], %184 {strides = array<i32>} : memref<64x32xf32, #tpu.memory_space<vmem>>, vector<8x32xf32>,
    %cst_57 = arith.constant dense<0.000000e+00> : vector<8x128xf32>
    %187 = tpu.matmul %159, %7, %cst_57 {dimension_numbers = #tpu.dot_dimension_numbers<[1], [0], [0], [1], [0, 0, 1, 1], [], []>} : vector<8x32xf32>, vector<32x128xf32>, vector<8x128xf32> -> vector<8x128xf32>
    %c24 = arith.constant 24 : index
    %c0_58 = arith.constant 0 : index
    %188 = vector.load %arg9[%c24, %c0_58] : memref<64x256xf32, #tpu.memory_space<vmem>>, vector<8x128xf32>
    %189 = arith.addf %187, %188 : vector<8x128xf32>
    %cst_59 = arith.constant dense<0.000000e+00> : vector<8x128xf32>
    %190 = tpu.matmul %184, %8, %cst_59 {dimension_numbers = #tpu.dot_dimension_numbers<[1], [0], [0], [1], [0, 0, 1, 1], [], []>} : vector<8x32xf32>, vector<32x128xf32>, vector<8x128xf32> -> vector<8x128xf32>
    %c32 = arith.constant 32 : index
    %c128_60 = arith.constant 128 : index
    %191 = vector.load %arg9[%c32, %c128_60] : memref<64x256xf32, #tpu.memory_space<vmem>>, vector<8x128xf32>
    %192 = arith.addf %190, %191 : vector<8x128xf32>
    %193 = vector.extract_strided_slice %189 {offsets = [0, 0], sizes = [8, 32], strides = [1, 1]} : vector<8x128xf32> to vector<8x32xf32>
    %194 = arith.negf %193 : vector<8x32xf32>
    %195 = math.exp %194 : vector<8x32xf32>
    %cst_61 = arith.constant 1.000000e+00 : f32
    %196 = vector.broadcast %cst_61 : f32 to vector<8x32xf32>
    %197 = arith.addf %196, %195 : vector<8x32xf32>
    %198 = arith.divf %196, %197 : vector<8x32xf32>
    %199 = vector.extract_strided_slice %189 {offsets = [0, 32], sizes = [8, 32], strides = [1, 1]} : vector<8x128xf32> to vector<8x32xf32>
    %200 = arith.negf %199 : vector<8x32xf32>
    %201 = math.exp %200 : vector<8x32xf32>
    %cst_62 = arith.constant 1.000000e+00 : f32
    %202 = vector.broadcast %cst_62 : f32 to vector<8x32xf32>
    %203 = arith.addf %202, %201 : vector<8x32xf32>
    %204 = arith.divf %202, %203 : vector<8x32xf32>
    %205 = vector.extract_strided_slice %189 {offsets = [0, 64], sizes = [8, 32], strides = [1, 1]} : vector<8x128xf32> to vector<8x32xf32>
    %206 = math.tanh %205 : vector<8x32xf32>
    %207 = vector.extract_strided_slice %189 {offsets = [0, 96], sizes = [8, 32], strides = [1, 1]} : vector<8x128xf32> to vector<8x32xf32>
    %208 = arith.negf %207 : vector<8x32xf32>
    %209 = math.exp %208 : vector<8x32xf32>
    %cst_63 = arith.constant 1.000000e+00 : f32
    %210 = vector.broadcast %cst_63 : f32 to vector<8x32xf32>
    %211 = arith.addf %210, %209 : vector<8x32xf32>
    %212 = arith.divf %210, %211 : vector<8x32xf32>
    %213 = arith.mulf %204, %157 : vector<8x32xf32>
    %214 = arith.mulf %198, %206 : vector<8x32xf32>
    %215 = arith.addf %213, %214 : vector<8x32xf32>
    %216 = math.tanh %215 : vector<8x32xf32>
    %217 = arith.mulf %212, %216 : vector<8x32xf32>
    %218 = vector.extract_strided_slice %192 {offsets = [0, 0], sizes = [8, 32], strides = [1, 1]} : vector<8x128xf32> to vector<8x32xf32>
    %219 = arith.negf %218 : vector<8x32xf32>
    %220 = math.exp %219 : vector<8x32xf32>
    %cst_64 = arith.constant 1.000000e+00 : f32
    %221 = vector.broadcast %cst_64 : f32 to vector<8x32xf32>
    %222 = arith.addf %221, %220 : vector<8x32xf32>
    %223 = arith.divf %221, %222 : vector<8x32xf32>
    %224 = vector.extract_strided_slice %192 {offsets = [0, 32], sizes = [8, 32], strides = [1, 1]} : vector<8x128xf32> to vector<8x32xf32>
    %225 = arith.negf %224 : vector<8x32xf32>
    %226 = math.exp %225 : vector<8x32xf32>
    %cst_65 = arith.constant 1.000000e+00 : f32
    %227 = vector.broadcast %cst_65 : f32 to vector<8x32xf32>
    %228 = arith.addf %227, %226 : vector<8x32xf32>
    %229 = arith.divf %227, %228 : vector<8x32xf32>
    %230 = vector.extract_strided_slice %192 {offsets = [0, 64], sizes = [8, 32], strides = [1, 1]} : vector<8x128xf32> to vector<8x32xf32>
    %231 = math.tanh %230 : vector<8x32xf32>
    %232 = vector.extract_strided_slice %192 {offsets = [0, 96], sizes = [8, 32], strides = [1, 1]} : vector<8x128xf32> to vector<8x32xf32>
    %233 = arith.negf %232 : vector<8x32xf32>
    %234 = math.exp %233 : vector<8x32xf32>
    %cst_66 = arith.constant 1.000000e+00 : f32
    %235 = vector.broadcast %cst_66 : f32 to vector<8x32xf32>
    %236 = arith.addf %235, %234 : vector<8x32xf32>
    %237 = arith.divf %235, %236 : vector<8x32xf32>
    %238 = arith.mulf %229, %182 : vector<8x32xf32>
    %239 = arith.mulf %223, %231 : vector<8x32xf32>
    %240 = arith.addf %238, %239 : vector<8x32xf32>
    %241 = math.tanh %240 : vector<8x32xf32>
    %242 = arith.mulf %237, %241 : vector<8x32xf32>
    %c24_67 = arith.constant 24 : index
    %c0_68 = arith.constant 0 : index
    %243 = vector.load %arg10[%c24_67, %c0_68] : memref<64x32xf32, #tpu.memory_space<vmem>>, vector<8x32xf32>
    tpu.vector_store %arg10[%c24_67, %c0_68], %217 {strides = array<i32>} : memref<64x32xf32, #tpu.memory_space<vmem>>, vector<8x32xf32>,
    %c32_69 = arith.constant 32 : index
    %c0_70 = arith.constant 0 : index
    %244 = vector.load %arg11[%c32_69, %c0_70] : memref<64x32xf32, #tpu.memory_space<vmem>>, vector<8x32xf32>
    tpu.vector_store %arg11[%c32_69, %c0_70], %242 {strides = array<i32>} : memref<64x32xf32, #tpu.memory_space<vmem>>, vector<8x32xf32>,
    %cst_71 = arith.constant dense<0.000000e+00> : vector<8x128xf32>
    %245 = tpu.matmul %217, %7, %cst_71 {dimension_numbers = #tpu.dot_dimension_numbers<[1], [0], [0], [1], [0, 0, 1, 1], [], []>} : vector<8x32xf32>, vector<32x128xf32>, vector<8x128xf32> -> vector<8x128xf32>
    %c32_72 = arith.constant 32 : index
    %c0_73 = arith.constant 0 : index
    %246 = vector.load %arg9[%c32_72, %c0_73] : memref<64x256xf32, #tpu.memory_space<vmem>>, vector<8x128xf32>
    %247 = arith.addf %245, %246 : vector<8x128xf32>
    %cst_74 = arith.constant dense<0.000000e+00> : vector<8x128xf32>
    %248 = tpu.matmul %242, %8, %cst_74 {dimension_numbers = #tpu.dot_dimension_numbers<[1], [0], [0], [1], [0, 0, 1, 1], [], []>} : vector<8x32xf32>, vector<32x128xf32>, vector<8x128xf32> -> vector<8x128xf32>
    %c24_75 = arith.constant 24 : index
    %c128_76 = arith.constant 128 : index
    %249 = vector.load %arg9[%c24_75, %c128_76] : memref<64x256xf32, #tpu.memory_space<vmem>>, vector<8x128xf32>
    %250 = arith.addf %248, %249 : vector<8x128xf32>
    %251 = vector.extract_strided_slice %247 {offsets = [0, 0], sizes = [8, 32], strides = [1, 1]} : vector<8x128xf32> to vector<8x32xf32>
    %252 = arith.negf %251 : vector<8x32xf32>
    %253 = math.exp %252 : vector<8x32xf32>
    %cst_77 = arith.constant 1.000000e+00 : f32
    %254 = vector.broadcast %cst_77 : f32 to vector<8x32xf32>
    %255 = arith.addf %254, %253 : vector<8x32xf32>
    %256 = arith.divf %254, %255 : vector<8x32xf32>
    %257 = vector.extract_strided_slice %247 {offsets = [0, 32], sizes = [8, 32], strides = [1, 1]} : vector<8x128xf32> to vector<8x32xf32>
    %258 = arith.negf %257 : vector<8x32xf32>
    %259 = math.exp %258 : vector<8x32xf32>
    %cst_78 = arith.constant 1.000000e+00 : f32
    %260 = vector.broadcast %cst_78 : f32 to vector<8x32xf32>
    %261 = arith.addf %260, %259 : vector<8x32xf32>
    %262 = arith.divf %260, %261 : vector<8x32xf32>
    %263 = vector.extract_strided_slice %247 {offsets = [0, 64], sizes = [8, 32], strides = [1, 1]} : vector<8x128xf32> to vector<8x32xf32>
    %264 = math.tanh %263 : vector<8x32xf32>
    %265 = vector.extract_strided_slice %247 {offsets = [0, 96], sizes = [8, 32], strides = [1, 1]} : vector<8x128xf32> to vector<8x32xf32>
    %266 = arith.negf %265 : vector<8x32xf32>
    %267 = math.exp %266 : vector<8x32xf32>
    %cst_79 = arith.constant 1.000000e+00 : f32
    %268 = vector.broadcast %cst_79 : f32 to vector<8x32xf32>
    %269 = arith.addf %268, %267 : vector<8x32xf32>
    %270 = arith.divf %268, %269 : vector<8x32xf32>
    %271 = arith.mulf %262, %215 : vector<8x32xf32>
    %272 = arith.mulf %256, %264 : vector<8x32xf32>
    %273 = arith.addf %271, %272 : vector<8x32xf32>
    %274 = math.tanh %273 : vector<8x32xf32>
    %275 = arith.mulf %270, %274 : vector<8x32xf32>
    %276 = vector.extract_strided_slice %250 {offsets = [0, 0], sizes = [8, 32], strides = [1, 1]} : vector<8x128xf32> to vector<8x32xf32>
    %277 = arith.negf %276 : vector<8x32xf32>
    %278 = math.exp %277 : vector<8x32xf32>
    %cst_80 = arith.constant 1.000000e+00 : f32
    %279 = vector.broadcast %cst_80 : f32 to vector<8x32xf32>
    %280 = arith.addf %279, %278 : vector<8x32xf32>
    %281 = arith.divf %279, %280 : vector<8x32xf32>
    %282 = vector.extract_strided_slice %250 {offsets = [0, 32], sizes = [8, 32], strides = [1, 1]} : vector<8x128xf32> to vector<8x32xf32>
    %283 = arith.negf %282 : vector<8x32xf32>
    %284 = math.exp %283 : vector<8x32xf32>
    %cst_81 = arith.constant 1.000000e+00 : f32
    %285 = vector.broadcast %cst_81 : f32 to vector<8x32xf32>
    %286 = arith.addf %285, %284 : vector<8x32xf32>
    %287 = arith.divf %285, %286 : vector<8x32xf32>
    %288 = vector.extract_strided_slice %250 {offsets = [0, 64], sizes = [8, 32], strides = [1, 1]} : vector<8x128xf32> to vector<8x32xf32>
    %289 = math.tanh %288 : vector<8x32xf32>
    %290 = vector.extract_strided_slice %250 {offsets = [0, 96], sizes = [8, 32], strides = [1, 1]} : vector<8x128xf32> to vector<8x32xf32>
    %291 = arith.negf %290 : vector<8x32xf32>
    %292 = math.exp %291 : vector<8x32xf32>
    %cst_82 = arith.constant 1.000000e+00 : f32
    %293 = vector.broadcast %cst_82 : f32 to vector<8x32xf32>
    %294 = arith.addf %293, %292 : vector<8x32xf32>
    %295 = arith.divf %293, %294 : vector<8x32xf32>
    %296 = arith.mulf %287, %240 : vector<8x32xf32>
    %297 = arith.mulf %281, %289 : vector<8x32xf32>
    %298 = arith.addf %296, %297 : vector<8x32xf32>
    %299 = math.tanh %298 : vector<8x32xf32>
    %300 = arith.mulf %295, %299 : vector<8x32xf32>
    %c32_83 = arith.constant 32 : index
    %c0_84 = arith.constant 0 : index
    %301 = vector.load %arg10[%c32_83, %c0_84] : memref<64x32xf32, #tpu.memory_space<vmem>>, vector<8x32xf32>
    tpu.vector_store %arg10[%c32_83, %c0_84], %275 {strides = array<i32>} : memref<64x32xf32, #tpu.memory_space<vmem>>, vector<8x32xf32>,
    %c24_85 = arith.constant 24 : index
    %c0_86 = arith.constant 0 : index
    %302 = vector.load %arg11[%c24_85, %c0_86] : memref<64x32xf32, #tpu.memory_space<vmem>>, vector<8x32xf32>
    tpu.vector_store %arg11[%c24_85, %c0_86], %300 {strides = array<i32>} : memref<64x32xf32, #tpu.memory_space<vmem>>, vector<8x32xf32>,
    %cst_87 = arith.constant dense<0.000000e+00> : vector<8x128xf32>
    %303 = tpu.matmul %275, %7, %cst_87 {dimension_numbers = #tpu.dot_dimension_numbers<[1], [0], [0], [1], [0, 0, 1, 1], [], []>} : vector<8x32xf32>, vector<32x128xf32>, vector<8x128xf32> -> vector<8x128xf32>
    %c40_88 = arith.constant 40 : index
    %c0_89 = arith.constant 0 : index
    %304 = vector.load %arg9[%c40_88, %c0_89] : memref<64x256xf32, #tpu.memory_space<vmem>>, vector<8x128xf32>
    %305 = arith.addf %303, %304 : vector<8x128xf32>
    %cst_90 = arith.constant dense<0.000000e+00> : vector<8x128xf32>
    %306 = tpu.matmul %300, %8, %cst_90 {dimension_numbers = #tpu.dot_dimension_numbers<[1], [0], [0], [1], [0, 0, 1, 1], [], []>} : vector<8x32xf32>, vector<32x128xf32>, vector<8x128xf32> -> vector<8x128xf32>
    %c16_91 = arith.constant 16 : index
    %c128_92 = arith.constant 128 : index
    %307 = vector.load %arg9[%c16_91, %c128_92] : memref<64x256xf32, #tpu.memory_space<vmem>>, vector<8x128xf32>
    %308 = arith.addf %306, %307 : vector<8x128xf32>
    %309 = vector.extract_strided_slice %305 {offsets = [0, 0], sizes = [8, 32], strides = [1, 1]} : vector<8x128xf32> to vector<8x32xf32>
    %310 = arith.negf %309 : vector<8x32xf32>
    %311 = math.exp %310 : vector<8x32xf32>
    %cst_93 = arith.constant 1.000000e+00 : f32
    %312 = vector.broadcast %cst_93 : f32 to vector<8x32xf32>
    %313 = arith.addf %312, %311 : vector<8x32xf32>
    %314 = arith.divf %312, %313 : vector<8x32xf32>
    %315 = vector.extract_strided_slice %305 {offsets = [0, 32], sizes = [8, 32], strides = [1, 1]} : vector<8x128xf32> to vector<8x32xf32>
    %316 = arith.negf %315 : vector<8x32xf32>
    %317 = math.exp %316 : vector<8x32xf32>
    %cst_94 = arith.constant 1.000000e+00 : f32
    %318 = vector.broadcast %cst_94 : f32 to vector<8x32xf32>
    %319 = arith.addf %318, %317 : vector<8x32xf32>
    %320 = arith.divf %318, %319 : vector<8x32xf32>
    %321 = vector.extract_strided_slice %305 {offsets = [0, 64], sizes = [8, 32], strides = [1, 1]} : vector<8x128xf32> to vector<8x32xf32>
    %322 = math.tanh %321 : vector<8x32xf32>
    %323 = vector.extract_strided_slice %305 {offsets = [0, 96], sizes = [8, 32], strides = [1, 1]} : vector<8x128xf32> to vector<8x32xf32>
    %324 = arith.negf %323 : vector<8x32xf32>
    %325 = math.exp %324 : vector<8x32xf32>
    %cst_95 = arith.constant 1.000000e+00 : f32
    %326 = vector.broadcast %cst_95 : f32 to vector<8x32xf32>
    %327 = arith.addf %326, %325 : vector<8x32xf32>
    %328 = arith.divf %326, %327 : vector<8x32xf32>
    %329 = arith.mulf %320, %273 : vector<8x32xf32>
    %330 = arith.mulf %314, %322 : vector<8x32xf32>
    %331 = arith.addf %329, %330 : vector<8x32xf32>
    %332 = math.tanh %331 : vector<8x32xf32>
    %333 = arith.mulf %328, %332 : vector<8x32xf32>
    %334 = vector.extract_strided_slice %308 {offsets = [0, 0], sizes = [8, 32], strides = [1, 1]} : vector<8x128xf32> to vector<8x32xf32>
    %335 = arith.negf %334 : vector<8x32xf32>
    %336 = math.exp %335 : vector<8x32xf32>
    %cst_96 = arith.constant 1.000000e+00 : f32
    %337 = vector.broadcast %cst_96 : f32 to vector<8x32xf32>
    %338 = arith.addf %337, %336 : vector<8x32xf32>
    %339 = arith.divf %337, %338 : vector<8x32xf32>
    %340 = vector.extract_strided_slice %308 {offsets = [0, 32], sizes = [8, 32], strides = [1, 1]} : vector<8x128xf32> to vector<8x32xf32>
    %341 = arith.negf %340 : vector<8x32xf32>
    %342 = math.exp %341 : vector<8x32xf32>
    %cst_97 = arith.constant 1.000000e+00 : f32
    %343 = vector.broadcast %cst_97 : f32 to vector<8x32xf32>
    %344 = arith.addf %343, %342 : vector<8x32xf32>
    %345 = arith.divf %343, %344 : vector<8x32xf32>
    %346 = vector.extract_strided_slice %308 {offsets = [0, 64], sizes = [8, 32], strides = [1, 1]} : vector<8x128xf32> to vector<8x32xf32>
    %347 = math.tanh %346 : vector<8x32xf32>
    %348 = vector.extract_strided_slice %308 {offsets = [0, 96], sizes = [8, 32], strides = [1, 1]} : vector<8x128xf32> to vector<8x32xf32>
    %349 = arith.negf %348 : vector<8x32xf32>
    %350 = math.exp %349 : vector<8x32xf32>
    %cst_98 = arith.constant 1.000000e+00 : f32
    %351 = vector.broadcast %cst_98 : f32 to vector<8x32xf32>
    %352 = arith.addf %351, %350 : vector<8x32xf32>
    %353 = arith.divf %351, %352 : vector<8x32xf32>
    %354 = arith.mulf %345, %298 : vector<8x32xf32>
    %355 = arith.mulf %339, %347 : vector<8x32xf32>
    %356 = arith.addf %354, %355 : vector<8x32xf32>
    %357 = math.tanh %356 : vector<8x32xf32>
    %358 = arith.mulf %353, %357 : vector<8x32xf32>
    %c40_99 = arith.constant 40 : index
    %c0_100 = arith.constant 0 : index
    %359 = vector.load %arg10[%c40_99, %c0_100] : memref<64x32xf32, #tpu.memory_space<vmem>>, vector<8x32xf32>
    tpu.vector_store %arg10[%c40_99, %c0_100], %333 {strides = array<i32>} : memref<64x32xf32, #tpu.memory_space<vmem>>, vector<8x32xf32>,
    %c16_101 = arith.constant 16 : index
    %c0_102 = arith.constant 0 : index
    %360 = vector.load %arg11[%c16_101, %c0_102] : memref<64x32xf32, #tpu.memory_space<vmem>>, vector<8x32xf32>
    tpu.vector_store %arg11[%c16_101, %c0_102], %358 {strides = array<i32>} : memref<64x32xf32, #tpu.memory_space<vmem>>, vector<8x32xf32>,
    %cst_103 = arith.constant dense<0.000000e+00> : vector<8x128xf32>
    %361 = tpu.matmul %333, %7, %cst_103 {dimension_numbers = #tpu.dot_dimension_numbers<[1], [0], [0], [1], [0, 0, 1, 1], [], []>} : vector<8x32xf32>, vector<32x128xf32>, vector<8x128xf32> -> vector<8x128xf32>
    %c48_104 = arith.constant 48 : index
    %c0_105 = arith.constant 0 : index
    %362 = vector.load %arg9[%c48_104, %c0_105] : memref<64x256xf32, #tpu.memory_space<vmem>>, vector<8x128xf32>
    %363 = arith.addf %361, %362 : vector<8x128xf32>
    %cst_106 = arith.constant dense<0.000000e+00> : vector<8x128xf32>
    %364 = tpu.matmul %358, %8, %cst_106 {dimension_numbers = #tpu.dot_dimension_numbers<[1], [0], [0], [1], [0, 0, 1, 1], [], []>} : vector<8x32xf32>, vector<32x128xf32>, vector<8x128xf32> -> vector<8x128xf32>
    %c8_107 = arith.constant 8 : index
    %c128_108 = arith.constant 128 : index
    %365 = vector.load %arg9[%c8_107, %c128_108] : memref<64x256xf32, #tpu.memory_space<vmem>>, vector<8x128xf32>
    %366 = arith.addf %364, %365 : vector<8x128xf32>
    %367 = vector.extract_strided_slice %363 {offsets = [0, 0], sizes = [8, 32], strides = [1, 1]} : vector<8x128xf32> to vector<8x32xf32>
    %368 = arith.negf %367 : vector<8x32xf32>
    %369 = math.exp %368 : vector<8x32xf32>
    %cst_109 = arith.constant 1.000000e+00 : f32
    %370 = vector.broadcast %cst_109 : f32 to vector<8x32xf32>
    %371 = arith.addf %370, %369 : vector<8x32xf32>
    %372 = arith.divf %370, %371 : vector<8x32xf32>
    %373 = vector.extract_strided_slice %363 {offsets = [0, 32], sizes = [8, 32], strides = [1, 1]} : vector<8x128xf32> to vector<8x32xf32>
    %374 = arith.negf %373 : vector<8x32xf32>
    %375 = math.exp %374 : vector<8x32xf32>
    %cst_110 = arith.constant 1.000000e+00 : f32
    %376 = vector.broadcast %cst_110 : f32 to vector<8x32xf32>
    %377 = arith.addf %376, %375 : vector<8x32xf32>
    %378 = arith.divf %376, %377 : vector<8x32xf32>
    %379 = vector.extract_strided_slice %363 {offsets = [0, 64], sizes = [8, 32], strides = [1, 1]} : vector<8x128xf32> to vector<8x32xf32>
    %380 = math.tanh %379 : vector<8x32xf32>
    %381 = vector.extract_strided_slice %363 {offsets = [0, 96], sizes = [8, 32], strides = [1, 1]} : vector<8x128xf32> to vector<8x32xf32>
    %382 = arith.negf %381 : vector<8x32xf32>
    %383 = math.exp %382 : vector<8x32xf32>
    %cst_111 = arith.constant 1.000000e+00 : f32
    %384 = vector.broadcast %cst_111 : f32 to vector<8x32xf32>
    %385 = arith.addf %384, %383 : vector<8x32xf32>
    %386 = arith.divf %384, %385 : vector<8x32xf32>
    %387 = arith.mulf %378, %331 : vector<8x32xf32>
    %388 = arith.mulf %372, %380 : vector<8x32xf32>
    %389 = arith.addf %387, %388 : vector<8x32xf32>
    %390 = math.tanh %389 : vector<8x32xf32>
    %391 = arith.mulf %386, %390 : vector<8x32xf32>
    %392 = vector.extract_strided_slice %366 {offsets = [0, 0], sizes = [8, 32], strides = [1, 1]} : vector<8x128xf32> to vector<8x32xf32>
    %393 = arith.negf %392 : vector<8x32xf32>
    %394 = math.exp %393 : vector<8x32xf32>
    %cst_112 = arith.constant 1.000000e+00 : f32
    %395 = vector.broadcast %cst_112 : f32 to vector<8x32xf32>
    %396 = arith.addf %395, %394 : vector<8x32xf32>
    %397 = arith.divf %395, %396 : vector<8x32xf32>
    %398 = vector.extract_strided_slice %366 {offsets = [0, 32], sizes = [8, 32], strides = [1, 1]} : vector<8x128xf32> to vector<8x32xf32>
    %399 = arith.negf %398 : vector<8x32xf32>
    %400 = math.exp %399 : vector<8x32xf32>
    %cst_113 = arith.constant 1.000000e+00 : f32
    %401 = vector.broadcast %cst_113 : f32 to vector<8x32xf32>
    %402 = arith.addf %401, %400 : vector<8x32xf32>
    %403 = arith.divf %401, %402 : vector<8x32xf32>
    %404 = vector.extract_strided_slice %366 {offsets = [0, 64], sizes = [8, 32], strides = [1, 1]} : vector<8x128xf32> to vector<8x32xf32>
    %405 = math.tanh %404 : vector<8x32xf32>
    %406 = vector.extract_strided_slice %366 {offsets = [0, 96], sizes = [8, 32], strides = [1, 1]} : vector<8x128xf32> to vector<8x32xf32>
    %407 = arith.negf %406 : vector<8x32xf32>
    %408 = math.exp %407 : vector<8x32xf32>
    %cst_114 = arith.constant 1.000000e+00 : f32
    %409 = vector.broadcast %cst_114 : f32 to vector<8x32xf32>
    %410 = arith.addf %409, %408 : vector<8x32xf32>
    %411 = arith.divf %409, %410 : vector<8x32xf32>
    %412 = arith.mulf %403, %356 : vector<8x32xf32>
    %413 = arith.mulf %397, %405 : vector<8x32xf32>
    %414 = arith.addf %412, %413 : vector<8x32xf32>
    %415 = math.tanh %414 : vector<8x32xf32>
    %416 = arith.mulf %411, %415 : vector<8x32xf32>
    %c48_115 = arith.constant 48 : index
    %c0_116 = arith.constant 0 : index
    %417 = vector.load %arg10[%c48_115, %c0_116] : memref<64x32xf32, #tpu.memory_space<vmem>>, vector<8x32xf32>
    tpu.vector_store %arg10[%c48_115, %c0_116], %391 {strides = array<i32>} : memref<64x32xf32, #tpu.memory_space<vmem>>, vector<8x32xf32>,
    %c8_117 = arith.constant 8 : index
    %c0_118 = arith.constant 0 : index
    %418 = vector.load %arg11[%c8_117, %c0_118] : memref<64x32xf32, #tpu.memory_space<vmem>>, vector<8x32xf32>
    tpu.vector_store %arg11[%c8_117, %c0_118], %416 {strides = array<i32>} : memref<64x32xf32, #tpu.memory_space<vmem>>, vector<8x32xf32>,
    %cst_119 = arith.constant dense<0.000000e+00> : vector<8x128xf32>
    %419 = tpu.matmul %391, %7, %cst_119 {dimension_numbers = #tpu.dot_dimension_numbers<[1], [0], [0], [1], [0, 0, 1, 1], [], []>} : vector<8x32xf32>, vector<32x128xf32>, vector<8x128xf32> -> vector<8x128xf32>
    %c56_120 = arith.constant 56 : index
    %c0_121 = arith.constant 0 : index
    %420 = vector.load %arg9[%c56_120, %c0_121] : memref<64x256xf32, #tpu.memory_space<vmem>>, vector<8x128xf32>
    %421 = arith.addf %419, %420 : vector<8x128xf32>
    %cst_122 = arith.constant dense<0.000000e+00> : vector<8x128xf32>
    %422 = tpu.matmul %416, %8, %cst_122 {dimension_numbers = #tpu.dot_dimension_numbers<[1], [0], [0], [1], [0, 0, 1, 1], [], []>} : vector<8x32xf32>, vector<32x128xf32>, vector<8x128xf32> -> vector<8x128xf32>
    %c0_123 = arith.constant 0 : index
    %c128_124 = arith.constant 128 : index
    %423 = vector.load %arg9[%c0_123, %c128_124] : memref<64x256xf32, #tpu.memory_space<vmem>>, vector<8x128xf32>
    %424 = arith.addf %422, %423 : vector<8x128xf32>
    %425 = vector.extract_strided_slice %421 {offsets = [0, 0], sizes = [8, 32], strides = [1, 1]} : vector<8x128xf32> to vector<8x32xf32>
    %426 = arith.negf %425 : vector<8x32xf32>
    %427 = math.exp %426 : vector<8x32xf32>
    %cst_125 = arith.constant 1.000000e+00 : f32
    %428 = vector.broadcast %cst_125 : f32 to vector<8x32xf32>
    %429 = arith.addf %428, %427 : vector<8x32xf32>
    %430 = arith.divf %428, %429 : vector<8x32xf32>
    %431 = vector.extract_strided_slice %421 {offsets = [0, 32], sizes = [8, 32], strides = [1, 1]} : vector<8x128xf32> to vector<8x32xf32>
    %432 = arith.negf %431 : vector<8x32xf32>
    %433 = math.exp %432 : vector<8x32xf32>
    %cst_126 = arith.constant 1.000000e+00 : f32
    %434 = vector.broadcast %cst_126 : f32 to vector<8x32xf32>
    %435 = arith.addf %434, %433 : vector<8x32xf32>
    %436 = arith.divf %434, %435 : vector<8x32xf32>
    %437 = vector.extract_strided_slice %421 {offsets = [0, 64], sizes = [8, 32], strides = [1, 1]} : vector<8x128xf32> to vector<8x32xf32>
    %438 = math.tanh %437 : vector<8x32xf32>
    %439 = vector.extract_strided_slice %421 {offsets = [0, 96], sizes = [8, 32], strides = [1, 1]} : vector<8x128xf32> to vector<8x32xf32>
    %440 = arith.negf %439 : vector<8x32xf32>
    %441 = math.exp %440 : vector<8x32xf32>
    %cst_127 = arith.constant 1.000000e+00 : f32
    %442 = vector.broadcast %cst_127 : f32 to vector<8x32xf32>
    %443 = arith.addf %442, %441 : vector<8x32xf32>
    %444 = arith.divf %442, %443 : vector<8x32xf32>
    %445 = arith.mulf %436, %389 : vector<8x32xf32>
    %446 = arith.mulf %430, %438 : vector<8x32xf32>
    %447 = arith.addf %445, %446 : vector<8x32xf32>
    %448 = math.tanh %447 : vector<8x32xf32>
    %449 = arith.mulf %444, %448 : vector<8x32xf32>
    %450 = vector.extract_strided_slice %424 {offsets = [0, 0], sizes = [8, 32], strides = [1, 1]} : vector<8x128xf32> to vector<8x32xf32>
    %451 = arith.negf %450 : vector<8x32xf32>
    %452 = math.exp %451 : vector<8x32xf32>
    %cst_128 = arith.constant 1.000000e+00 : f32
    %453 = vector.broadcast %cst_128 : f32 to vector<8x32xf32>
    %454 = arith.addf %453, %452 : vector<8x32xf32>
    %455 = arith.divf %453, %454 : vector<8x32xf32>
    %456 = vector.extract_strided_slice %424 {offsets = [0, 32], sizes = [8, 32], strides = [1, 1]} : vector<8x128xf32> to vector<8x32xf32>
    %457 = arith.negf %456 : vector<8x32xf32>
    %458 = math.exp %457 : vector<8x32xf32>
    %cst_129 = arith.constant 1.000000e+00 : f32
    %459 = vector.broadcast %cst_129 : f32 to vector<8x32xf32>
    %460 = arith.addf %459, %458 : vector<8x32xf32>
    %461 = arith.divf %459, %460 : vector<8x32xf32>
    %462 = vector.extract_strided_slice %424 {offsets = [0, 64], sizes = [8, 32], strides = [1, 1]} : vector<8x128xf32> to vector<8x32xf32>
    %463 = math.tanh %462 : vector<8x32xf32>
    %464 = vector.extract_strided_slice %424 {offsets = [0, 96], sizes = [8, 32], strides = [1, 1]} : vector<8x128xf32> to vector<8x32xf32>
    %465 = arith.negf %464 : vector<8x32xf32>
    %466 = math.exp %465 : vector<8x32xf32>
    %cst_130 = arith.constant 1.000000e+00 : f32
    %467 = vector.broadcast %cst_130 : f32 to vector<8x32xf32>
    %468 = arith.addf %467, %466 : vector<8x32xf32>
    %469 = arith.divf %467, %468 : vector<8x32xf32>
    %470 = arith.mulf %461, %414 : vector<8x32xf32>
    %471 = arith.mulf %455, %463 : vector<8x32xf32>
    %472 = arith.addf %470, %471 : vector<8x32xf32>
    %473 = math.tanh %472 : vector<8x32xf32>
    %474 = arith.mulf %469, %473 : vector<8x32xf32>
    %c56_131 = arith.constant 56 : index
    %c0_132 = arith.constant 0 : index
    %475 = vector.load %arg10[%c56_131, %c0_132] : memref<64x32xf32, #tpu.memory_space<vmem>>, vector<8x32xf32>
    tpu.vector_store %arg10[%c56_131, %c0_132], %449 {strides = array<i32>} : memref<64x32xf32, #tpu.memory_space<vmem>>, vector<8x32xf32>,
    %c0_133 = arith.constant 0 : index
    %c0_134 = arith.constant 0 : index
    %476 = vector.load %arg11[%c0_133, %c0_134] : memref<64x32xf32, #tpu.memory_space<vmem>>, vector<8x32xf32>
    tpu.vector_store %arg11[%c0_133, %c0_134], %474 {strides = array<i32>} : memref<64x32xf32, #tpu.memory_space<vmem>>, vector<8x32xf32>,
    %c0_135 = arith.constant 0 : index
    %c0_136 = arith.constant 0 : index
    %477 = vector.load %arg10[%c0_135, %c0_136] : memref<64x32xf32, #tpu.memory_space<vmem>>, vector<64x32xf32>
    %c0_137 = arith.constant 0 : index
    %c0_138 = arith.constant 0 : index
    %478 = vector.load %arg5[%c0_137, %c0_138] : memref<32x4xf32, #tpu.memory_space<vmem>>, vector<32x4xf32>
    %cst_139 = arith.constant dense<0.000000e+00> : vector<64x4xf32>
    %479 = tpu.matmul %477, %478, %cst_139 {dimension_numbers = #tpu.dot_dimension_numbers<[1], [0], [0], [1], [0, 0, 1, 1], [], []>} : vector<64x32xf32>, vector<32x4xf32>, vector<64x4xf32> -> vector<64x4xf32>
    %c0_140 = arith.constant 0 : index
    %c0_141 = arith.constant 0 : index
    %480 = vector.load %arg11[%c0_140, %c0_141] : memref<64x32xf32, #tpu.memory_space<vmem>>, vector<64x32xf32>
    %c0_142 = arith.constant 0 : index
    %c0_143 = arith.constant 0 : index
    %481 = vector.load %arg6[%c0_142, %c0_143] : memref<32x4xf32, #tpu.memory_space<vmem>>, vector<32x4xf32>
    %cst_144 = arith.constant dense<0.000000e+00> : vector<64x4xf32>
    %482 = tpu.matmul %480, %481, %cst_144 {dimension_numbers = #tpu.dot_dimension_numbers<[1], [0], [0], [1], [0, 0, 1, 1], [], []>} : vector<64x32xf32>, vector<32x4xf32>, vector<64x4xf32> -> vector<64x4xf32>
    %483 = arith.addf %479, %482 : vector<64x4xf32>
    %c0_145 = arith.constant 0 : index
    %c0_146 = arith.constant 0 : index
    %484 = vector.load %arg7[%c0_145, %c0_146] : memref<1x4xf32, #tpu.memory_space<vmem>>, vector<1x4xf32>
    %485 = vector.broadcast %484 : vector<1x4xf32> to vector<64x4xf32>
    %486 = arith.addf %483, %485 : vector<64x4xf32>
    %c0_147 = arith.constant 0 : index
    %c0_148 = arith.constant 0 : index
    %487 = vector.load %arg8[%c0_147, %c0_148] : memref<64x4xf32, #tpu.memory_space<vmem>>, vector<64x4xf32>
    tpu.vector_store %arg8[%c0_147, %c0_148], %486 {strides = array<i32>} : memref<64x4xf32, #tpu.memory_space<vmem>>, vector<64x4xf32>,
    return
  }
}

</mosaic_0001>

<llo_original>
// kernel: tpu_custom_call.1
$region0: #{tpu_custom_call.1}
  #allocation0 [shape = 'u32[]', space=smem, size = 0x4, offset = 0x4, fixed_abs, tag = 'smem constant byte address 0x4 - core index']
  #allocation1 [shape = 'u32[144,128]{1,0:T(1,128)}', space=vmem, size = 0x12000, scoped, tag = 'internal scratch']
  #allocation2 [shape = 'f32[64,256]{1,0:T(8,128)}', space=vmem, size = 0x10000, scoped, tag = 'scratch operand']
  #allocation3 [shape = 'f32[64,32]{1,0:T(8,128)}', space=vmem, size = 0x8000, scoped, tag = 'scratch operand']
  #allocation4 [shape = 'f32[64,32]{1,0:T(8,128)}', space=vmem, size = 0x8000, scoped, tag = 'scratch operand']
  %s0 = inlined_call_operand.vmem [shape: f32[64,32], index: 0, kind: input, shape index: {}]
  %s1 = inlined_call_operand.vmem [shape: f32[32,256], index: 1, kind: input, shape index: {}]
  %s2 = inlined_call_operand.vmem [shape: f32[1,256], index: 2, kind: input, shape index: {}]
  %s3 = inlined_call_operand.vmem [shape: f32[32,128], index: 3, kind: input, shape index: {}]
  %s4 = inlined_call_operand.vmem [shape: f32[32,128], index: 4, kind: input, shape index: {}]
  %s5 = inlined_call_operand.vmem [shape: f32[32,4], index: 5, kind: input, shape index: {}]
  %s6 = inlined_call_operand.vmem [shape: f32[32,4], index: 6, kind: input, shape index: {}]
  %s7 = inlined_call_operand.vmem [shape: f32[1,4], index: 7, kind: input, shape index: {}]
  %s8 = inlined_call_operand.vmem [shape: f32[64,4], index: 8, kind: output, shape index: {}]
  %s9 = sld [smem:[#allocation0]]
  $region42: #{tpu_custom_call.1} parent=0
    _
  %s11 = ssub.s32 1, %s9
  %s12 = scalar_select 0, %s11, %s9
  // Predicated region
  $region2: #{tpu_custom_call.1} parent=0 // pred_check
    _
  $region3: #{tpu_custom_call.1} parent=0 // pred_check_branch
    %14 = sbr.rel (0) target = $region5
  $region4: #{tpu_custom_call.1} parent=0 // pred_region
    _
  $region5: #{tpu_custom_call.1} parent=0 // pred_fallthru
    _
  // Predicated region
  $region6: #{tpu_custom_call.1} parent=0 // pred_check
    _
  $region7: #{tpu_custom_call.1} parent=0 // pred_check_branch
    %16 = sbr.rel (0) target = $region9
  $region8: #{tpu_custom_call.1} parent=0 // pred_region
    _
  $region9: #{tpu_custom_call.1} parent=0 // pred_fallthru
    _
  // Predicated region
  $region10: #{tpu_custom_call.1} parent=0 // pred_check
    _
  $region11: #{tpu_custom_call.1} parent=0 // pred_check_branch
    %18 = sbr.rel (0) target = $region13
  $region12: #{tpu_custom_call.1} parent=0 // pred_region
    _
  $region13: #{tpu_custom_call.1} parent=0 // pred_fallthru
    _
  // Predicated region
  $region14: #{tpu_custom_call.1} parent=0 // pred_check
    _
  $region15: #{tpu_custom_call.1} parent=0 // pred_check_branch
    %20 = sbr.rel (0) target = $region17
  $region16: #{tpu_custom_call.1} parent=0 // pred_region
    _
  $region17: #{tpu_custom_call.1} parent=0 // pred_fallthru
    _
  // Predicated region
  $region18: #{tpu_custom_call.1} parent=0 // pred_check
    _
  $region19: #{tpu_custom_call.1} parent=0 // pred_check_branch
    %22 = sbr.rel (0) target = $region21
  $region20: #{tpu_custom_call.1} parent=0 // pred_region
    _
  $region21: #{tpu_custom_call.1} parent=0 // pred_fallthru
    _
  // Predicated region
  $region22: #{tpu_custom_call.1} parent=0 // pred_check
    _
  $region23: #{tpu_custom_call.1} parent=0 // pred_check_branch
    %24 = sbr.rel (0) target = $region25
  $region24: #{tpu_custom_call.1} parent=0 // pred_region
    _
  $region25: #{tpu_custom_call.1} parent=0 // pred_fallthru
    _
  // Predicated region
  $region26: #{tpu_custom_call.1} parent=0 // pred_check
    _
  $region27: #{tpu_custom_call.1} parent=0 // pred_check_branch
    %26 = sbr.rel (0) target = $region29
  $region28: #{tpu_custom_call.1} parent=0 // pred_region
    _
  $region29: #{tpu_custom_call.1} parent=0 // pred_fallthru
    _
  // Predicated region
  $region30: #{tpu_custom_call.1} parent=0 // pred_check
    _
  $region31: #{tpu_custom_call.1} parent=0 // pred_check_branch
    %28 = sbr.rel (0) target = $region33
  $region32: #{tpu_custom_call.1} parent=0 // pred_region
    _
  $region33: #{tpu_custom_call.1} parent=0 // pred_fallthru
    _
  %v29 = vld [vmem:[%s0] sm:$0xff]
  %v30 = vld [vmem:[%s0 + $0x8] sm:$0xff]
  %v31 = vld [vmem:[%s0 + $0x10] sm:$0xff]
  %v32 = vld [vmem:[%s0 + $0x18] sm:$0xff]
  %v33 = vld [vmem:[%s0 + $0x20] sm:$0xff]
  %v34 = vld [vmem:[%s0 + $0x28] sm:$0xff]
  %v35 = vld [vmem:[%s0 + $0x30] sm:$0xff]
  %v36 = vld [vmem:[%s0 + $0x38] sm:$0xff]
  %v37 = vld [vmem:[%s1] sm:$0xff]
  %v38 = vld [vmem:[%s1 + $0x8] sm:$0xff]
  %v39 = vld [vmem:[%s1 + $0x10] sm:$0xff]
  %v40 = vld [vmem:[%s1 + $0x18] sm:$0xff]
  %v41 = vld [vmem:[%s1 + $0x20] sm:$0xff]
  %v42 = vld [vmem:[%s1 + $0x28] sm:$0xff]
  %v43 = vld [vmem:[%s1 + $0x30] sm:$0xff]
  %v44 = vld [vmem:[%s1 + $0x38] sm:$0xff]
  %v45 = vld [vmem:[%s2] sm:$0x3]
  %v47 = vlaneseq
  %v48 = vshrl.u32 %v47, 7
  %v49 = vsub.s32 0, %v48
  %v50 = vrot.slane %v45, %v49
  %v51 = vlaneseq
  %v52 = vshrl.u32 %v51, 7
  %v53 = vsub.s32 1, %v52
  %v54 = vrot.slane %v45, %v53
  %vm57 = vcmask 261120
  %v59 = vsel %vm57, %v29, 0
  %v62 = vsel %vm57, %v30, 0
  %v65 = vsel %vm57, %v31, 0
  %v68 = vsel %vm57, %v32, 0
  %v71 = vsel %vm57, %v33, 0
  %v74 = vsel %vm57, %v34, 0
  %v77 = vsel %vm57, %v35, 0
  %v80 = vsel %vm57, %v36, 0
  %82 = vmatprep.subr.mxu0 0.0
  %83 = vmatpush1.msra.mxu0 0.0
  %84 = vmatprep.subr.mxu0 0.0
  %85 = vmatpush1.msra.mxu0 0.0
  %86 = vmatprep.subr.mxu0 0.0
  %87 = vmatpush1.msra.mxu0 0.0
  %88 = vmatprep.subr.mxu0 0.0
  %89 = vmatpush1.msra.mxu0 0.0
  %90 = vmatprep.subr.mxu0 0.0
  %91 = vmatpush1.msra.mxu0 0.0
  %92 = vmatprep.subr.mxu0 0.0
  %93 = vmatpush1.msra.mxu0 0.0
  %94 = vmatprep.subr.mxu0 0.0
  %95 = vmatpush1.msra.mxu0 0.0
  %96 = vmatprep.subr.mxu0 0.0
  %97 = vmatpush1.msra.mxu0 0.0
  %98 = vmatprep.subr.mxu0 0.0
  %99 = vmatpush1.msra.mxu0 0.0
  %100 = vmatprep.subr.mxu0 0.0
  %101 = vmatpush1.msra.mxu0 0.0
  %102 = vmatprep.subr.mxu0 0.0
  %103 = vmatpush1.msra.mxu0 0.0
  %104 = vmatprep.subr.mxu0 0.0
  %105 = vmatpush1.msra.mxu0 0.0
  %106 = vmatprep.subr.mxu0 %v44
  %107 = vmatpush1.msra.mxu0 %v43
  %108 = vmatprep.subr.mxu0 %v42
  %109 = vmatpush1.msra.mxu0 %v41
  %110 = vmatprep.subr.mxu0 %v40
  %111 = vmatpush1.msra.mxu0 %v39
  %112 = vmatprep.subr.mxu0 %v38
  %113 = vmatpush1.msra.mxu0 %v37
  %114 = vmatprep.subr.mxu0 0.0
  %115 = vmatpush2.msra.mxu0 0.0
  %116 = vmatprep.subr.mxu0 0.0
  %117 = vmatpush2.msra.mxu0 0.0
  %118 = vmatprep.subr.mxu0 0.0
  %119 = vmatpush2.msra.mxu0 0.0
  %120 = vmatprep.subr.mxu0 0.0
  %121 = vmatpush2.msra.mxu0 0.0
  %122 = vmatprep.subr.mxu0 0.0
  %123 = vmatpush2.msra.mxu0 0.0
  %124 = vmatprep.subr.mxu0 0.0
  %125 = vmatpush2.msra.mxu0 0.0
  %126 = vmatprep.subr.mxu0 0.0
  %127 = vmatpush2.msra.mxu0 0.0
  %128 = vmatprep.subr.mxu0 0.0
  %129 = vmatpush2.msra.mxu0 0.0
  %130 = vmatprep.subr.mxu0 0.0
  %131 = vmatpush2.msra.mxu0 0.0
  %132 = vmatprep.subr.mxu0 0.0
  %133 = vmatpush2.msra.mxu0 0.0
  %134 = vmatprep.subr.mxu0 0.0
  %135 = vmatpush2.msra.mxu0 0.0
  %136 = vmatprep.subr.mxu0 0.0
  %137 = vmatpush2.msra.mxu0 0.0
  %138 = vmatprep.subr.mxu0 0.0
  %139 = vmatpush2.msra.mxu0 0.0
  %140 = vmatprep.subr.mxu0 0.0
  %141 = vmatpush2.msra.mxu0 0.0
  %142 = vmatprep.subr.mxu0 0.0
  %143 = vmatpush2.msra.mxu0 0.0
  %144 = vmatprep.subr.mxu0 0.0
  %145 = vmatpush2.msra.mxu0 0.0
  %146 = vmatprep.mubr.f32.mxu0 0.0
  %147 = vmatmul.mubr.f32.gmra.mxu0 %v59
  %v148 = vpop.f32.mrf.mxu0
  %v149 = vadd.f32 %v50, %v148
  %v150 = vpop.f32.mrf.mxu0
  %v151 = vadd.f32 %v54, %v150
  %152 = vmatprep.mubr.f32.mxu0 0.0
  %153 = vmatmul.mubr.f32.gmra.mxu0 %v62
  %v154 = vpop.f32.mrf.mxu0
  %v155 = vadd.f32 %v50, %v154
  %v156 = vpop.f32.mrf.mxu0
  %v157 = vadd.f32 %v54, %v156
  %158 = vmatprep.mubr.f32.mxu0 0.0
  %159 = vmatmul.mubr.f32.gmra.mxu0 %v65
  %v160 = vpop.f32.mrf.mxu0
  %v161 = vadd.f32 %v50, %v160
  %v162 = vpop.f32.mrf.mxu0
  %v163 = vadd.f32 %v54, %v162
  %164 = vmatprep.mubr.f32.mxu0 0.0
  %165 = vmatmul.mubr.f32.gmra.mxu0 %v68
  %v166 = vpop.f32.mrf.mxu0
  %v167 = vadd.f32 %v50, %v166
  %v168 = vpop.f32.mrf.mxu0
  %v169 = vadd.f32 %v54, %v168
  %170 = vmatprep.mubr.f32.mxu0 0.0
  %171 = vmatmul.mubr.f32.gmra.mxu0 %v71
  %v172 = vpop.f32.mrf.mxu0
  %v173 = vadd.f32 %v50, %v172
  %v174 = vpop.f32.mrf.mxu0
  %v175 = vadd.f32 %v54, %v174
  %176 = vmatprep.mubr.f32.mxu0 0.0
  %177 = vmatmul.mubr.f32.gmra.mxu0 %v74
  %v178 = vpop.f32.mrf.mxu0
  %v179 = vadd.f32 %v50, %v178
  %v180 = vpop.f32.mrf.mxu0
  %v181 = vadd.f32 %v54, %v180
  %182 = vmatprep.mubr.f32.mxu0 0.0
  %183 = vmatmul.mubr.f32.gmra.mxu0 %v77
  %v184 = vpop.f32.mrf.mxu0
  %v185 = vadd.f32 %v50, %v184
  %v186 = vpop.f32.mrf.mxu0
  %v187 = vadd.f32 %v54, %v186
  %188 = vmatprep.mubr.f32.mxu0 0.0
  %189 = vmatmul.mubr.f32.gmra.mxu0 %v80
  %v190 = vpop.f32.mrf.mxu0
  %v191 = vadd.f32 %v50, %v190
  %v192 = vpop.f32.mrf.mxu0
  %v193 = vadd.f32 %v54, %v192
  %194 = vdwg.mxu0
  %195 = vst [vmem:[#allocation2] sm:$0xff] %v149
  %196 = vst [vmem:[#allocation2 + $0x8] sm:$0xff] %v151
  %197 = vst [vmem:[#allocation2 + $0x10] sm:$0xff] %v155
  %198 = vst [vmem:[#allocation2 + $0x18] sm:$0xff] %v157
  %199 = vst [vmem:[#allocation2 + $0x20] sm:$0xff] %v161
  %200 = vst [vmem:[#allocation2 + $0x28] sm:$0xff] %v163
  %201 = vst [vmem:[#allocation2 + $0x30] sm:$0xff] %v167
  %202 = vst [vmem:[#allocation2 + $0x38] sm:$0xff] %v169
  %203 = vst [vmem:[#allocation2 + $0x40] sm:$0xff] %v173
  %204 = vst [vmem:[#allocation2 + $0x48] sm:$0xff] %v175
  %205 = vst [vmem:[#allocation2 + $0x50] sm:$0xff] %v179
  %206 = vst [vmem:[#allocation2 + $0x58] sm:$0xff] %v181
  %207 = vst [vmem:[#allocation2 + $0x60] sm:$0xff] %v185
  %208 = vst [vmem:[#allocation2 + $0x68] sm:$0xff] %v187
  %209 = vst [vmem:[#allocation2 + $0x70] sm:$0xff] %v191
  %210 = vst [vmem:[#allocation2 + $0x78] sm:$0xff] %v193
  %v211 = vld [vmem:[%s3] sm:$0xff]
  %v212 = vld [vmem:[%s3 + $0x8] sm:$0xff]
  %v213 = vld [vmem:[%s3 + $0x10] sm:$0xff]
  %v214 = vld [vmem:[%s3 + $0x18] sm:$0xff]
  %v215 = vld [vmem:[%s4] sm:$0xff]
  %v216 = vld [vmem:[%s4 + $0x8] sm:$0xff]
  %v217 = vld [vmem:[%s4 + $0x10] sm:$0xff]
  %v218 = vld [vmem:[%s4 + $0x18] sm:$0xff]
  %v219 = vld [vmem:[#allocation2] sm:$0xff]
  %v221 = vsel %vm57, 0.0, 0
  %223 = vmatprep.subr.mxu0 0.0
  %224 = vmatpush1.msra.mxu0 0.0
  %225 = vmatprep.subr.mxu0 0.0
  %226 = vmatpush1.msra.mxu0 0.0
  %227 = vmatprep.subr.mxu0 0.0
  %228 = vmatpush1.msra.mxu0 0.0
  %229 = vmatprep.subr.mxu0 0.0
  %230 = vmatpush1.msra.mxu0 0.0
  %231 = vmatprep.subr.mxu0 0.0
  %232 = vmatpush1.msra.mxu0 0.0
  %233 = vmatprep.subr.mxu0 0.0
  %234 = vmatpush1.msra.mxu0 0.0
  %235 = vmatprep.subr.mxu0 0.0
  %236 = vmatpush1.msra.mxu0 0.0
  %237 = vmatprep.subr.mxu0 0.0
  %238 = vmatpush1.msra.mxu0 0.0
  %239 = vmatprep.subr.mxu0 0.0
  %240 = vmatpush1.msra.mxu0 0.0
  %241 = vmatprep.subr.mxu0 0.0
  %242 = vmatpush1.msra.mxu0 0.0
  %243 = vmatprep.subr.mxu0 0.0
  %244 = vmatpush1.msra.mxu0 0.0
  %245 = vmatprep.subr.mxu0 0.0
  %246 = vmatpush1.msra.mxu0 0.0
  %247 = vmatprep.subr.mxu0 0.0
  %248 = vmatpush1.msra.mxu0 %v214
  %249 = vmatprep.subr.mxu0 0.0
  %250 = vmatpush1.msra.mxu0 %v213
  %251 = vmatprep.subr.mxu0 0.0
  %252 = vmatpush1.msra.mxu0 %v212
  %253 = vmatprep.subr.mxu0 0.0
  %254 = vmatpush1.msra.mxu0 %v211
  %255 = vmatprep.subr.mxu0 0.0
  %256 = vmatpush2.msra.mxu0 0.0
  %257 = vmatprep.subr.mxu0 0.0
  %258 = vmatpush2.msra.mxu0 0.0
  %259 = vmatprep.subr.mxu0 0.0
  %260 = vmatpush2.msra.mxu0 0.0
  %261 = vmatprep.subr.mxu0 0.0
  %262 = vmatpush2.msra.mxu0 0.0
  %263 = vmatprep.subr.mxu0 0.0
  %264 = vmatpush2.msra.mxu0 0.0
  %265 = vmatprep.subr.mxu0 0.0
  %266 = vmatpush2.msra.mxu0 0.0
  %267 = vmatprep.subr.mxu0 0.0
  %268 = vmatpush2.msra.mxu0 0.0
  %269 = vmatprep.subr.mxu0 0.0
  %270 = vmatpush2.msra.mxu0 0.0
  %271 = vmatprep.subr.mxu0 0.0
  %272 = vmatpush2.msra.mxu0 0.0
  %273 = vmatprep.subr.mxu0 0.0
  %274 = vmatpush2.msra.mxu0 0.0
  %275 = vmatprep.subr.mxu0 0.0
  %276 = vmatpush2.msra.mxu0 0.0
  %277 = vmatprep.subr.mxu0 0.0
  %278 = vmatpush2.msra.mxu0 0.0
  %279 = vmatprep.subr.mxu0 0.0
  %280 = vmatpush2.msra.mxu0 0.0
  %281 = vmatprep.subr.mxu0 0.0
  %282 = vmatpush2.msra.mxu0 0.0
  %283 = vmatprep.subr.mxu0 0.0
  %284 = vmatpush2.msra.mxu0 0.0
  %285 = vmatprep.subr.mxu0 0.0
  %286 = vmatpush2.msra.mxu0 0.0
  %287 = vmatprep.mubr.f32.mxu0 0.0
  %288 = vmatmul.mubr.f32.gmra.mxu0 %v221
  %v289 = vpop.f32.mrf.mxu0
  %v290 = vadd.f32 %v219, %v289
  %v291 = vpop.f32.mrf.mxu0
  %292 = vdwg.mxu0
  %v293 = vld [vmem:[#allocation2 + $0x78] sm:$0xff]
  %294 = vmatprep.subr.mxu0 0.0
  %295 = vmatpush1.msra.mxu0 0.0
  %296 = vmatprep.subr.mxu0 0.0
  %297 = vmatpush1.msra.mxu0 0.0
  %298 = vmatprep.subr.mxu0 0.0
  %299 = vmatpush1.msra.mxu0 0.0
  %300 = vmatprep.subr.mxu0 0.0
  %301 = vmatpush1.msra.mxu0 0.0
  %302 = vmatprep.subr.mxu0 0.0
  %303 = vmatpush1.msra.mxu0 0.0
  %304 = vmatprep.subr.mxu0 0.0
  %305 = vmatpush1.msra.mxu0 0.0
  %306 = vmatprep.subr.mxu0 0.0
  %307 = vmatpush1.msra.mxu0 0.0
  %308 = vmatprep.subr.mxu0 0.0
  %309 = vmatpush1.msra.mxu0 0.0
  %310 = vmatprep.subr.mxu0 0.0
  %311 = vmatpush1.msra.mxu0 0.0
  %312 = vmatprep.subr.mxu0 0.0
  %313 = vmatpush1.msra.mxu0 0.0
  %314 = vmatprep.subr.mxu0 0.0
  %315 = vmatpush1.msra.mxu0 0.0
  %316 = vmatprep.subr.mxu0 0.0
  %317 = vmatpush1.msra.mxu0 0.0
  %318 = vmatprep.subr.mxu0 0.0
  %319 = vmatpush1.msra.mxu0 %v218
  %320 = vmatprep.subr.mxu0 0.0
  %321 = vmatpush1.msra.mxu0 %v217
  %322 = vmatprep.subr.mxu0 0.0
  %323 = vmatpush1.msra.mxu0 %v216
  %324 = vmatprep.subr.mxu0 0.0
  %325 = vmatpush1.msra.mxu0 %v215
  %326 = vmatprep.subr.mxu0 0.0
  %327 = vmatpush2.msra.mxu0 0.0
  %328 = vmatprep.subr.mxu0 0.0
  %329 = vmatpush2.msra.mxu0 0.0
  %330 = vmatprep.subr.mxu0 0.0
  %331 = vmatpush2.msra.mxu0 0.0
  %332 = vmatprep.subr.mxu0 0.0
  %333 = vmatpush2.msra.mxu0 0.0
  %334 = vmatprep.subr.mxu0 0.0
  %335 = vmatpush2.msra.mxu0 0.0
  %336 = vmatprep.subr.mxu0 0.0
  %337 = vmatpush2.msra.mxu0 0.0
  %338 = vmatprep.subr.mxu0 0.0
  %339 = vmatpush2.msra.mxu0 0.0
  %340 = vmatprep.subr.mxu0 0.0
  %341 = vmatpush2.msra.mxu0 0.0
  %342 = vmatprep.subr.mxu0 0.0
  %343 = vmatpush2.msra.mxu0 0.0
  %344 = vmatprep.subr.mxu0 0.0
  %345 = vmatpush2.msra.mxu0 0.0
  %346 = vmatprep.subr.mxu0 0.0
  %347 = vmatpush2.msra.mxu0 0.0
  %348 = vmatprep.subr.mxu0 0.0
  %349 = vmatpush2.msra.mxu0 0.0
  %350 = vmatprep.subr.mxu0 0.0
  %351 = vmatpush2.msra.mxu0 0.0
  %352 = vmatprep.subr.mxu0 0.0
  %353 = vmatpush2.msra.mxu0 0.0
  %354 = vmatprep.subr.mxu0 0.0
  %355 = vmatpush2.msra.mxu0 0.0
  %356 = vmatprep.subr.mxu0 0.0
  %357 = vmatpush2.msra.mxu0 0.0
  %358 = vmatprep.mubr.f32.mxu0 0.0
  %359 = vmatmul.mubr.f32.gmra.mxu0 %v221
  %v360 = vpop.f32.mrf.mxu0
  %v361 = vadd.f32 %v293, %v360
  %v362 = vpop.f32.mrf.mxu0
  %363 = vdwg.mxu0
  %v364 = vxor.u32 %v290, 2147483648
  %v365 = vmul.f32 %v364, 1.442695
  %v366 = vpow.pop %v365
  %v367 = vadd.f32 %v366, 1.0
  %v368 = vrcp.pop %v367
  %v369 = vmul.f32 1.0, %v368
  %v370 = vtanh.pop %v290
  %v371 = vmul.f32 %v369, 0.0
  %373 = vrot.lane.b32.xlu0 %v370, 64
  %v374 = vpop.permute.xlu0 %373
  %v376 = vmul.f32 %v369, %v374
  %378 = vrot.lane.b32.xlu0 %v376, 32
  %v379 = vpop.permute.xlu0 %378
  %v381 = vadd.f32 %v371, %v379
  %v382 = vtanh.pop %v381
  %384 = vrot.lane.b32.xlu0 %v382, 64
  %v385 = vpop.permute.xlu0 %384
  %v387 = vmul.f32 %v369, %v385
  %v388 = vxor.u32 %v361, 2147483648
  %v389 = vmul.f32 %v388, 1.442695
  %v390 = vpow.pop %v389
  %v391 = vadd.f32 %v390, 1.0
  %v392 = vrcp.pop %v391
  %v393 = vmul.f32 1.0, %v392
  %v394 = vtanh.pop %v361
  %v395 = vmul.f32 %v393, 0.0
  %397 = vrot.lane.b32.xlu0 %v394, 64
  %v398 = vpop.permute.xlu0 %397
  %v400 = vmul.f32 %v393, %v398
  %402 = vrot.lane.b32.xlu0 %v400, 32
  %v403 = vpop.permute.xlu0 %402
  %v405 = vadd.f32 %v395, %v403
  %v406 = vtanh.pop %v405
  %408 = vrot.lane.b32.xlu0 %v406, 64
  %v409 = vpop.permute.xlu0 %408
  %v411 = vmul.f32 %v393, %v409
  %413 = vrot.lane.b32.xlu0 %v387, 32
  %v414 = vpop.permute.xlu0 %413
  %416 = vst.msk [vmem:[#allocation3] sm:$0xff] %vm57, %v414
  %418 = vrot.lane.b32.xlu0 %v411, 32
  %v419 = vpop.permute.xlu0 %418
  %421 = vst.msk [vmem:[#allocation4 + $0x38] sm:$0xff] %vm57, %v419
  %v422 = vld [vmem:[#allocation2 + $0x10] sm:$0xff]
  %v423 = vsel %vm57, %v414, 0
  %425 = vmatprep.subr.mxu0 0.0
  %426 = vmatpush1.msra.mxu0 0.0
  %427 = vmatprep.subr.mxu0 0.0
  %428 = vmatpush1.msra.mxu0 0.0
  %429 = vmatprep.subr.mxu0 0.0
  %430 = vmatpush1.msra.mxu0 0.0
  %431 = vmatprep.subr.mxu0 0.0
  %432 = vmatpush1.msra.mxu0 0.0
  %433 = vmatprep.subr.mxu0 0.0
  %434 = vmatpush1.msra.mxu0 0.0
  %435 = vmatprep.subr.mxu0 0.0
  %436 = vmatpush1.msra.mxu0 0.0
  %437 = vmatprep.subr.mxu0 0.0
  %438 = vmatpush1.msra.mxu0 0.0
  %439 = vmatprep.subr.mxu0 0.0
  %440 = vmatpush1.msra.mxu0 0.0
  %441 = vmatprep.subr.mxu0 0.0
  %442 = vmatpush1.msra.mxu0 0.0
  %443 = vmatprep.subr.mxu0 0.0
  %444 = vmatpush1.msra.mxu0 0.0
  %445 = vmatprep.subr.mxu0 0.0
  %446 = vmatpush1.msra.mxu0 0.0
  %447 = vmatprep.subr.mxu0 0.0
  %448 = vmatpush1.msra.mxu0 0.0
  %449 = vmatprep.subr.mxu0 0.0
  %450 = vmatpush1.msra.mxu0 %v214
  %451 = vmatprep.subr.mxu0 0.0
  %452 = vmatpush1.msra.mxu0 %v213
  %453 = vmatprep.subr.mxu0 0.0
  %454 = vmatpush1.msra.mxu0 %v212
  %455 = vmatprep.subr.mxu0 0.0
  %456 = vmatpush1.msra.mxu0 %v211
  %457 = vmatprep.subr.mxu0 0.0
  %458 = vmatpush2.msra.mxu0 0.0
  %459 = vmatprep.subr.mxu0 0.0
  %460 = vmatpush2.msra.mxu0 0.0
  %461 = vmatprep.subr.mxu0 0.0
  %462 = vmatpush2.msra.mxu0 0.0
  %463 = vmatprep.subr.mxu0 0.0
  %464 = vmatpush2.msra.mxu0 0.0
  %465 = vmatprep.subr.mxu0 0.0
  %466 = vmatpush2.msra.mxu0 0.0
  %467 = vmatprep.subr.mxu0 0.0
  %468 = vmatpush2.msra.mxu0 0.0
  %469 = vmatprep.subr.mxu0 0.0
  %470 = vmatpush2.msra.mxu0 0.0
  %471 = vmatprep.subr.mxu0 0.0
  %472 = vmatpush2.msra.mxu0 0.0
  %473 = vmatprep.subr.mxu0 0.0
  %474 = vmatpush2.msra.mxu0 0.0
  %475 = vmatprep.subr.mxu0 0.0
  %476 = vmatpush2.msra.mxu0 0.0
  %477 = vmatprep.subr.mxu0 0.0
  %478 = vmatpush2.msra.mxu0 0.0
  %479 = vmatprep.subr.mxu0 0.0
  %480 = vmatpush2.msra.mxu0 0.0
  %481 = vmatprep.subr.mxu0 0.0
  %482 = vmatpush2.msra.mxu0 0.0
  %483 = vmatprep.subr.mxu0 0.0
  %484 = vmatpush2.msra.mxu0 0.0
  %485 = vmatprep.subr.mxu0 0.0
  %486 = vmatpush2.msra.mxu0 0.0
  %487 = vmatprep.subr.mxu0 0.0
  %488 = vmatpush2.msra.mxu0 0.0
  %489 = vmatprep.mubr.f32.mxu0 0.0
  %490 = vmatmul.mubr.f32.gmra.mxu0 %v423
  %v491 = vpop.f32.mrf.mxu0
  %v492 = vadd.f32 %v422, %v491
  %v493 = vpop.f32.mrf.mxu0
  %494 = vdwg.mxu0
  %v495 = vld [vmem:[#allocation2 + $0x68] sm:$0xff]
  %v496 = vsel %vm57, %v419, 0
  %498 = vmatprep.subr.mxu0 0.0
  %499 = vmatpush1.msra.mxu0 0.0
  %500 = vmatprep.subr.mxu0 0.0
  %501 = vmatpush1.msra.mxu0 0.0
  %502 = vmatprep.subr.mxu0 0.0
  %503 = vmatpush1.msra.mxu0 0.0
  %504 = vmatprep.subr.mxu0 0.0
  %505 = vmatpush1.msra.mxu0 0.0
  %506 = vmatprep.subr.mxu0 0.0
  %507 = vmatpush1.msra.mxu0 0.0
  %508 = vmatprep.subr.mxu0 0.0
  %509 = vmatpush1.msra.mxu0 0.0
  %510 = vmatprep.subr.mxu0 0.0
  %511 = vmatpush1.msra.mxu0 0.0
  %512 = vmatprep.subr.mxu0 0.0
  %513 = vmatpush1.msra.mxu0 0.0
  %514 = vmatprep.subr.mxu0 0.0
  %515 = vmatpush1.msra.mxu0 0.0
  %516 = vmatprep.subr.mxu0 0.0
  %517 = vmatpush1.msra.mxu0 0.0
  %518 = vmatprep.subr.mxu0 0.0
  %519 = vmatpush1.msra.mxu0 0.0
  %520 = vmatprep.subr.mxu0 0.0
  %521 = vmatpush1.msra.mxu0 0.0
  %522 = vmatprep.subr.mxu0 0.0
  %523 = vmatpush1.msra.mxu0 %v218
  %524 = vmatprep.subr.mxu0 0.0
  %525 = vmatpush1.msra.mxu0 %v217
  %526 = vmatprep.subr.mxu0 0.0
  %527 = vmatpush1.msra.mxu0 %v216
  %528 = vmatprep.subr.mxu0 0.0
  %529 = vmatpush1.msra.mxu0 %v215
  %530 = vmatprep.subr.mxu0 0.0
  %531 = vmatpush2.msra.mxu0 0.0
  %532 = vmatprep.subr.mxu0 0.0
  %533 = vmatpush2.msra.mxu0 0.0
  %534 = vmatprep.subr.mxu0 0.0
  %535 = vmatpush2.msra.mxu0 0.0
  %536 = vmatprep.subr.mxu0 0.0
  %537 = vmatpush2.msra.mxu0 0.0
  %538 = vmatprep.subr.mxu0 0.0
  %539 = vmatpush2.msra.mxu0 0.0
  %540 = vmatprep.subr.mxu0 0.0
  %541 = vmatpush2.msra.mxu0 0.0
  %542 = vmatprep.subr.mxu0 0.0
  %543 = vmatpush2.msra.mxu0 0.0
  %544 = vmatprep.subr.mxu0 0.0
  %545 = vmatpush2.msra.mxu0 0.0
  %546 = vmatprep.subr.mxu0 0.0
  %547 = vmatpush2.msra.mxu0 0.0
  %548 = vmatprep.subr.mxu0 0.0
  %549 = vmatpush2.msra.mxu0 0.0
  %550 = vmatprep.subr.mxu0 0.0
  %551 = vmatpush2.msra.mxu0 0.0
  %552 = vmatprep.subr.mxu0 0.0
  %553 = vmatpush2.msra.mxu0 0.0
  %554 = vmatprep.subr.mxu0 0.0
  %555 = vmatpush2.msra.mxu0 0.0
  %556 = vmatprep.subr.mxu0 0.0
  %557 = vmatpush2.msra.mxu0 0.0
  %558 = vmatprep.subr.mxu0 0.0
  %559 = vmatpush2.msra.mxu0 0.0
  %560 = vmatprep.subr.mxu0 0.0
  %561 = vmatpush2.msra.mxu0 0.0
  %562 = vmatprep.mubr.f32.mxu0 0.0
  %563 = vmatmul.mubr.f32.gmra.mxu0 %v496
  %v564 = vpop.f32.mrf.mxu0
  %v565 = vadd.f32 %v495, %v564
  %v566 = vpop.f32.mrf.mxu0
  %567 = vdwg.mxu0
  %v568 = vxor.u32 %v492, 2147483648
  %v569 = vmul.f32 %v568, 1.442695
  %v570 = vpow.pop %v569
  %v571 = vadd.f32 %v570, 1.0
  %v572 = vrcp.pop %v571
  %v573 = vmul.f32 1.0, %v572
  %v574 = vtanh.pop %v492
  %v575 = vmul.f32 %v573, %v381
  %577 = vrot.lane.b32.xlu0 %v574, 64
  %v578 = vpop.permute.xlu0 %577
  %v580 = vmul.f32 %v573, %v578
  %582 = vrot.lane.b32.xlu0 %v580, 32
  %v583 = vpop.permute.xlu0 %582
  %v585 = vadd.f32 %v575, %v583
  %v586 = vtanh.pop %v585
  %588 = vrot.lane.b32.xlu0 %v586, 64
  %v589 = vpop.permute.xlu0 %588
  %v591 = vmul.f32 %v573, %v589
  %v592 = vxor.u32 %v565, 2147483648
  %v593 = vmul.f32 %v592, 1.442695
  %v594 = vpow.pop %v593
  %v595 = vadd.f32 %v594, 1.0
  %v596 = vrcp.pop %v595
  %v597 = vmul.f32 1.0, %v596
  %v598 = vtanh.pop %v565
  %v599 = vmul.f32 %v597, %v405
  %601 = vrot.lane.b32.xlu0 %v598, 64
  %v602 = vpop.permute.xlu0 %601
  %v604 = vmul.f32 %v597, %v602
  %606 = vrot.lane.b32.xlu0 %v604, 32
  %v607 = vpop.permute.xlu0 %606
  %v609 = vadd.f32 %v599, %v607
  %v610 = vtanh.pop %v609
  %612 = vrot.lane.b32.xlu0 %v610, 64
  %v613 = vpop.permute.xlu0 %612
  %v615 = vmul.f32 %v597, %v613
  %617 = vrot.lane.b32.xlu0 %v591, 32
  %v618 = vpop.permute.xlu0 %617
  %620 = vst.msk [vmem:[#allocation3 + $0x8] sm:$0xff] %vm57, %v618
  %622 = vrot.lane.b32.xlu0 %v615, 32
  %v623 = vpop.permute.xlu0 %622
  %625 = vst.msk [vmem:[#allocation4 + $0x30] sm:$0xff] %vm57, %v623
  %v626 = vld [vmem:[#allocation2 + $0x20] sm:$0xff]
  %v627 = vsel %vm57, %v618, 0
  %629 = vmatprep.subr.mxu0 0.0
  %630 = vmatpush1.msra.mxu0 0.0
  %631 = vmatprep.subr.mxu0 0.0
  %632 = vmatpush1.msra.mxu0 0.0
  %633 = vmatprep.subr.mxu0 0.0
  %634 = vmatpush1.msra.mxu0 0.0
  %635 = vmatprep.subr.mxu0 0.0
  %636 = vmatpush1.msra.mxu0 0.0
  %637 = vmatprep.subr.mxu0 0.0
  %638 = vmatpush1.msra.mxu0 0.0
  %639 = vmatprep.subr.mxu0 0.0
  %640 = vmatpush1.msra.mxu0 0.0
  %641 = vmatprep.subr.mxu0 0.0
  %642 = vmatpush1.msra.mxu0 0.0
  %643 = vmatprep.subr.mxu0 0.0
  %644 = vmatpush1.msra.mxu0 0.0
  %645 = vmatprep.subr.mxu0 0.0
  %646 = vmatpush1.msra.mxu0 0.0
  %647 = vmatprep.subr.mxu0 0.0
  %648 = vmatpush1.msra.mxu0 0.0
  %649 = vmatprep.subr.mxu0 0.0
  %650 = vmatpush1.msra.mxu0 0.0
  %651 = vmatprep.subr.mxu0 0.0
  %652 = vmatpush1.msra.mxu0 0.0
  %653 = vmatprep.subr.mxu0 0.0
  %654 = vmatpush1.msra.mxu0 %v214
  %655 = vmatprep.subr.mxu0 0.0
  %656 = vmatpush1.msra.mxu0 %v213
  %657 = vmatprep.subr.mxu0 0.0
  %658 = vmatpush1.msra.mxu0 %v212
  %659 = vmatprep.subr.mxu0 0.0
  %660 = vmatpush1.msra.mxu0 %v211
  %661 = vmatprep.subr.mxu0 0.0
  %662 = vmatpush2.msra.mxu0 0.0
  %663 = vmatprep.subr.mxu0 0.0
  %664 = vmatpush2.msra.mxu0 0.0
  %665 = vmatprep.subr.mxu0 0.0
  %666 = vmatpush2.msra.mxu0 0.0
  %667 = vmatprep.subr.mxu0 0.0
  %668 = vmatpush2.msra.mxu0 0.0
  %669 = vmatprep.subr.mxu0 0.0
  %670 = vmatpush2.msra.mxu0 0.0
  %671 = vmatprep.subr.mxu0 0.0
  %672 = vmatpush2.msra.mxu0 0.0
  %673 = vmatprep.subr.mxu0 0.0
  %674 = vmatpush2.msra.mxu0 0.0
  %675 = vmatprep.subr.mxu0 0.0
  %676 = vmatpush2.msra.mxu0 0.0
  %677 = vmatprep.subr.mxu0 0.0
  %678 = vmatpush2.msra.mxu0 0.0
  %679 = vmatprep.subr.mxu0 0.0
  %680 = vmatpush2.msra.mxu0 0.0
  %681 = vmatprep.subr.mxu0 0.0
  %682 = vmatpush2.msra.mxu0 0.0
  %683 = vmatprep.subr.mxu0 0.0
  %684 = vmatpush2.msra.mxu0 0.0
  %685 = vmatprep.subr.mxu0 0.0
  %686 = vmatpush2.msra.mxu0 0.0
  %687 = vmatprep.subr.mxu0 0.0
  %688 = vmatpush2.msra.mxu0 0.0
  %689 = vmatprep.subr.mxu0 0.0
  %690 = vmatpush2.msra.mxu0 0.0
  %691 = vmatprep.subr.mxu0 0.0
  %692 = vmatpush2.msra.mxu0 0.0
  %693 = vmatprep.mubr.f32.mxu0 0.0
  %694 = vmatmul.mubr.f32.gmra.mxu0 %v627
  %v695 = vpop.f32.mrf.mxu0
  %v696 = vadd.f32 %v626, %v695
  %v697 = vpop.f32.mrf.mxu0
  %698 = vdwg.mxu0
  %v699 = vld [vmem:[#allocation2 + $0x58] sm:$0xff]
  %v700 = vsel %vm57, %v623, 0
  %702 = vmatprep.subr.mxu0 0.0
  %703 = vmatpush1.msra.mxu0 0.0
  %704 = vmatprep.subr.mxu0 0.0
  %705 = vmatpush1.msra.mxu0 0.0
  %706 = vmatprep.subr.mxu0 0.0
  %707 = vmatpush1.msra.mxu0 0.0
  %708 = vmatprep.subr.mxu0 0.0
  %709 = vmatpush1.msra.mxu0 0.0
  %710 = vmatprep.subr.mxu0 0.0
  %711 = vmatpush1.msra.mxu0 0.0
  %712 = vmatprep.subr.mxu0 0.0
  %713 = vmatpush1.msra.mxu0 0.0
  %714 = vmatprep.subr.mxu0 0.0
  %715 = vmatpush1.msra.mxu0 0.0
  %716 = vmatprep.subr.mxu0 0.0
  %717 = vmatpush1.msra.mxu0 0.0
  %718 = vmatprep.subr.mxu0 0.0
  %719 = vmatpush1.msra.mxu0 0.0
  %720 = vmatprep.subr.mxu0 0.0
  %721 = vmatpush1.msra.mxu0 0.0
  %722 = vmatprep.subr.mxu0 0.0
  %723 = vmatpush1.msra.mxu0 0.0
  %724 = vmatprep.subr.mxu0 0.0
  %725 = vmatpush1.msra.mxu0 0.0
  %726 = vmatprep.subr.mxu0 0.0
  %727 = vmatpush1.msra.mxu0 %v218
  %728 = vmatprep.subr.mxu0 0.0
  %729 = vmatpush1.msra.mxu0 %v217
  %730 = vmatprep.subr.mxu0 0.0
  %731 = vmatpush1.msra.mxu0 %v216
  %732 = vmatprep.subr.mxu0 0.0
  %733 = vmatpush1.msra.mxu0 %v215
  %734 = vmatprep.subr.mxu0 0.0
  %735 = vmatpush2.msra.mxu0 0.0
  %736 = vmatprep.subr.mxu0 0.0
  %737 = vmatpush2.msra.mxu0 0.0
  %738 = vmatprep.subr.mxu0 0.0
  %739 = vmatpush2.msra.mxu0 0.0
  %740 = vmatprep.subr.mxu0 0.0
  %741 = vmatpush2.msra.mxu0 0.0
  %742 = vmatprep.subr.mxu0 0.0
  %743 = vmatpush2.msra.mxu0 0.0
  %744 = vmatprep.subr.mxu0 0.0
  %745 = vmatpush2.msra.mxu0 0.0
  %746 = vmatprep.subr.mxu0 0.0
  %747 = vmatpush2.msra.mxu0 0.0
  %748 = vmatprep.subr.mxu0 0.0
  %749 = vmatpush2.msra.mxu0 0.0
  %750 = vmatprep.subr.mxu0 0.0
  %751 = vmatpush2.msra.mxu0 0.0
  %752 = vmatprep.subr.mxu0 0.0
  %753 = vmatpush2.msra.mxu0 0.0
  %754 = vmatprep.subr.mxu0 0.0
  %755 = vmatpush2.msra.mxu0 0.0
  %756 = vmatprep.subr.mxu0 0.0
  %757 = vmatpush2.msra.mxu0 0.0
  %758 = vmatprep.subr.mxu0 0.0
  %759 = vmatpush2.msra.mxu0 0.0
  %760 = vmatprep.subr.mxu0 0.0
  %761 = vmatpush2.msra.mxu0 0.0
  %762 = vmatprep.subr.mxu0 0.0
  %763 = vmatpush2.msra.mxu0 0.0
  %764 = vmatprep.subr.mxu0 0.0
  %765 = vmatpush2.msra.mxu0 0.0
  %766 = vmatprep.mubr.f32.mxu0 0.0
  %767 = vmatmul.mubr.f32.gmra.mxu0 %v700
  %v768 = vpop.f32.mrf.mxu0
  %v769 = vadd.f32 %v699, %v768
  %v770 = vpop.f32.mrf.mxu0
  %771 = vdwg.mxu0
  %v772 = vxor.u32 %v696, 2147483648
  %v773 = vmul.f32 %v772, 1.442695
  %v774 = vpow.pop %v773
  %v775 = vadd.f32 %v774, 1.0
  %v776 = vrcp.pop %v775
  %v777 = vmul.f32 1.0, %v776
  %v778 = vtanh.pop %v696
  %v779 = vmul.f32 %v777, %v585
  %781 = vrot.lane.b32.xlu0 %v778, 64
  %v782 = vpop.permute.xlu0 %781
  %v784 = vmul.f32 %v777, %v782
  %786 = vrot.lane.b32.xlu0 %v784, 32
  %v787 = vpop.permute.xlu0 %786
  %v789 = vadd.f32 %v779, %v787
  %v790 = vtanh.pop %v789
  %792 = vrot.lane.b32.xlu0 %v790, 64
  %v793 = vpop.permute.xlu0 %792
  %v795 = vmul.f32 %v777, %v793
  %v796 = vxor.u32 %v769, 2147483648
  %v797 = vmul.f32 %v796, 1.442695
  %v798 = vpow.pop %v797
  %v799 = vadd.f32 %v798, 1.0
  %v800 = vrcp.pop %v799
  %v801 = vmul.f32 1.0, %v800
  %v802 = vtanh.pop %v769
  %v803 = vmul.f32 %v801, %v609
  %805 = vrot.lane.b32.xlu0 %v802, 64
  %v806 = vpop.permute.xlu0 %805
  %v808 = vmul.f32 %v801, %v806
  %810 = vrot.lane.b32.xlu0 %v808, 32
  %v811 = vpop.permute.xlu0 %810
  %v813 = vadd.f32 %v803, %v811
  %v814 = vtanh.pop %v813
  %816 = vrot.lane.b32.xlu0 %v814, 64
  %v817 = vpop.permute.xlu0 %816
  %v819 = vmul.f32 %v801, %v817
  %821 = vrot.lane.b32.xlu0 %v795, 32
  %v822 = vpop.permute.xlu0 %821
  %824 = vst.msk [vmem:[#allocation3 + $0x10] sm:$0xff] %vm57, %v822
  %826 = vrot.lane.b32.xlu0 %v819, 32
  %v827 = vpop.permute.xlu0 %826
  %829 = vst.msk [vmem:[#allocation4 + $0x28] sm:$0xff] %vm57, %v827
  %v830 = vld [vmem:[#allocation2 + $0x30] sm:$0xff]
  %v831 = vsel %vm57, %v822, 0
  %833 = vmatprep.subr.mxu0 0.0
  %834 = vmatpush1.msra.mxu0 0.0
  %835 = vmatprep.subr.mxu0 0.0
  %836 = vmatpush1.msra.mxu0 0.0
  %837 = vmatprep.subr.mxu0 0.0
  %838 = vmatpush1.msra.mxu0 0.0
  %839 = vmatprep.subr.mxu0 0.0
  %840 = vmatpush1.msra.mxu0 0.0
  %841 = vmatprep.subr.mxu0 0.0
  %842 = vmatpush1.msra.mxu0 0.0
  %843 = vmatprep.subr.mxu0 0.0
  %844 = vmatpush1.msra.mxu0 0.0
  %845 = vmatprep.subr.mxu0 0.0
  %846 = vmatpush1.msra.mxu0 0.0
  %847 = vmatprep.subr.mxu0 0.0
  %848 = vmatpush1.msra.mxu0 0.0
  %849 = vmatprep.subr.mxu0 0.0
  %850 = vmatpush1.msra.mxu0 0.0
  %851 = vmatprep.subr.mxu0 0.0
  %852 = vmatpush1.msra.mxu0 0.0
  %853 = vmatprep.subr.mxu0 0.0
  %854 = vmatpush1.msra.mxu0 0.0
  %855 = vmatprep.subr.mxu0 0.0
  %856 = vmatpush1.msra.mxu0 0.0
  %857 = vmatprep.subr.mxu0 0.0
  %858 = vmatpush1.msra.mxu0 %v214
  %859 = vmatprep.subr.mxu0 0.0
  %860 = vmatpush1.msra.mxu0 %v213
  %861 = vmatprep.subr.mxu0 0.0
  %862 = vmatpush1.msra.mxu0 %v212
  %863 = vmatprep.subr.mxu0 0.0
  %864 = vmatpush1.msra.mxu0 %v211
  %865 = vmatprep.subr.mxu0 0.0
  %866 = vmatpush2.msra.mxu0 0.0
  %867 = vmatprep.subr.mxu0 0.0
  %868 = vmatpush2.msra.mxu0 0.0
  %869 = vmatprep.subr.mxu0 0.0
  %870 = vmatpush2.msra.mxu0 0.0
  %871 = vmatprep.subr.mxu0 0.0
  %872 = vmatpush2.msra.mxu0 0.0
  %873 = vmatprep.subr.mxu0 0.0
  %874 = vmatpush2.msra.mxu0 0.0
  %875 = vmatprep.subr.mxu0 0.0
  %876 = vmatpush2.msra.mxu0 0.0
  %877 = vmatprep.subr.mxu0 0.0
  %878 = vmatpush2.msra.mxu0 0.0
  %879 = vmatprep.subr.mxu0 0.0
  %880 = vmatpush2.msra.mxu0 0.0
  %881 = vmatprep.subr.mxu0 0.0
  %882 = vmatpush2.msra.mxu0 0.0
  %883 = vmatprep.subr.mxu0 0.0
  %884 = vmatpush2.msra.mxu0 0.0
  %885 = vmatprep.subr.mxu0 0.0
  %886 = vmatpush2.msra.mxu0 0.0
  %887 = vmatprep.subr.mxu0 0.0
  %888 = vmatpush2.msra.mxu0 0.0
  %889 = vmatprep.subr.mxu0 0.0
  %890 = vmatpush2.msra.mxu0 0.0
  %891 = vmatprep.subr.mxu0 0.0
  %892 = vmatpush2.msra.mxu0 0.0
  %893 = vmatprep.subr.mxu0 0.0
  %894 = vmatpush2.msra.mxu0 0.0
  %895 = vmatprep.subr.mxu0 0.0
  %896 = vmatpush2.msra.mxu0 0.0
  %897 = vmatprep.mubr.f32.mxu0 0.0
  %898 = vmatmul.mubr.f32.gmra.mxu0 %v831
  %v899 = vpop.f32.mrf.mxu0
  %v900 = vadd.f32 %v830, %v899
  %v901 = vpop.f32.mrf.mxu0
  %902 = vdwg.mxu0
  %v903 = vld [vmem:[#allocation2 + $0x48] sm:$0xff]
  %v904 = vsel %vm57, %v827, 0
  %906 = vmatprep.subr.mxu0 0.0
  %907 = vmatpush1.msra.mxu0 0.0
  %908 = vmatprep.subr.mxu0 0.0
  %909 = vmatpush1.msra.mxu0 0.0
  %910 = vmatprep.subr.mxu0 0.0
  %911 = vmatpush1.msra.mxu0 0.0
  %912 = vmatprep.subr.mxu0 0.0
  %913 = vmatpush1.msra.mxu0 0.0
  %914 = vmatprep.subr.mxu0 0.0
  %915 = vmatpush1.msra.mxu0 0.0
  %916 = vmatprep.subr.mxu0 0.0
  %917 = vmatpush1.msra.mxu0 0.0
  %918 = vmatprep.subr.mxu0 0.0
  %919 = vmatpush1.msra.mxu0 0.0
  %920 = vmatprep.subr.mxu0 0.0
  %921 = vmatpush1.msra.mxu0 0.0
  %922 = vmatprep.subr.mxu0 0.0
  %923 = vmatpush1.msra.mxu0 0.0
  %924 = vmatprep.subr.mxu0 0.0
  %925 = vmatpush1.msra.mxu0 0.0
  %926 = vmatprep.subr.mxu0 0.0
  %927 = vmatpush1.msra.mxu0 0.0
  %928 = vmatprep.subr.mxu0 0.0
  %929 = vmatpush1.msra.mxu0 0.0
  %930 = vmatprep.subr.mxu0 0.0
  %931 = vmatpush1.msra.mxu0 %v218
  %932 = vmatprep.subr.mxu0 0.0
  %933 = vmatpush1.msra.mxu0 %v217
  %934 = vmatprep.subr.mxu0 0.0
  %935 = vmatpush1.msra.mxu0 %v216
  %936 = vmatprep.subr.mxu0 0.0
  %937 = vmatpush1.msra.mxu0 %v215
  %938 = vmatprep.subr.mxu0 0.0
  %939 = vmatpush2.msra.mxu0 0.0
  %940 = vmatprep.subr.mxu0 0.0
  %941 = vmatpush2.msra.mxu0 0.0
  %942 = vmatprep.subr.mxu0 0.0
  %943 = vmatpush2.msra.mxu0 0.0
  %944 = vmatprep.subr.mxu0 0.0
  %945 = vmatpush2.msra.mxu0 0.0
  %946 = vmatprep.subr.mxu0 0.0
  %947 = vmatpush2.msra.mxu0 0.0
  %948 = vmatprep.subr.mxu0 0.0
  %949 = vmatpush2.msra.mxu0 0.0
  %950 = vmatprep.subr.mxu0 0.0
  %951 = vmatpush2.msra.mxu0 0.0
  %952 = vmatprep.subr.mxu0 0.0
  %953 = vmatpush2.msra.mxu0 0.0
  %954 = vmatprep.subr.mxu0 0.0
  %955 = vmatpush2.msra.mxu0 0.0
  %956 = vmatprep.subr.mxu0 0.0
  %957 = vmatpush2.msra.mxu0 0.0
  %958 = vmatprep.subr.mxu0 0.0
  %959 = vmatpush2.msra.mxu0 0.0
  %960 = vmatprep.subr.mxu0 0.0
  %961 = vmatpush2.msra.mxu0 0.0
  %962 = vmatprep.subr.mxu0 0.0
  %963 = vmatpush2.msra.mxu0 0.0
  %964 = vmatprep.subr.mxu0 0.0
  %965 = vmatpush2.msra.mxu0 0.0
  %966 = vmatprep.subr.mxu0 0.0
  %967 = vmatpush2.msra.mxu0 0.0
  %968 = vmatprep.subr.mxu0 0.0
  %969 = vmatpush2.msra.mxu0 0.0
  %970 = vmatprep.mubr.f32.mxu0 0.0
  %971 = vmatmul.mubr.f32.gmra.mxu0 %v904
  %v972 = vpop.f32.mrf.mxu0
  %v973 = vadd.f32 %v903, %v972
  %v974 = vpop.f32.mrf.mxu0
  %975 = vdwg.mxu0
  %v976 = vxor.u32 %v900, 2147483648
  %v977 = vmul.f32 %v976, 1.442695
  %v978 = vpow.pop %v977
  %v979 = vadd.f32 %v978, 1.0
  %v980 = vrcp.pop %v979
  %v981 = vmul.f32 1.0, %v980
  %v982 = vtanh.pop %v900
  %v983 = vmul.f32 %v981, %v789
  %985 = vrot.lane.b32.xlu0 %v982, 64
  %v986 = vpop.permute.xlu0 %985
  %v988 = vmul.f32 %v981, %v986
  %990 = vrot.lane.b32.xlu0 %v988, 32
  %v991 = vpop.permute.xlu0 %990
  %v993 = vadd.f32 %v983, %v991
  %v994 = vtanh.pop %v993
  %996 = vrot.lane.b32.xlu0 %v994, 64
  %v997 = vpop.permute.xlu0 %996
  %v999 = vmul.f32 %v981, %v997
  %v1000 = vxor.u32 %v973, 2147483648
  %v1001 = vmul.f32 %v1000, 1.442695
  %v1002 = vpow.pop %v1001
  %v1003 = vadd.f32 %v1002, 1.0
  %v1004 = vrcp.pop %v1003
  %v1005 = vmul.f32 1.0, %v1004
  %v1006 = vtanh.pop %v973
  %v1007 = vmul.f32 %v1005, %v813
  %1009 = vrot.lane.b32.xlu0 %v1006, 64
  %v1010 = vpop.permute.xlu0 %1009
  %v1012 = vmul.f32 %v1005, %v1010
  %1014 = vrot.lane.b32.xlu0 %v1012, 32
  %v1015 = vpop.permute.xlu0 %1014
  %v1017 = vadd.f32 %v1007, %v1015
  %v1018 = vtanh.pop %v1017
  %1020 = vrot.lane.b32.xlu0 %v1018, 64
  %v1021 = vpop.permute.xlu0 %1020
  %v1023 = vmul.f32 %v1005, %v1021
  %1025 = vrot.lane.b32.xlu0 %v999, 32
  %v1026 = vpop.permute.xlu0 %1025
  %1028 = vst.msk [vmem:[#allocation3 + $0x18] sm:$0xff] %vm57, %v1026
  %1030 = vrot.lane.b32.xlu0 %v1023, 32
  %v1031 = vpop.permute.xlu0 %1030
  %1033 = vst.msk [vmem:[#allocation4 + $0x20] sm:$0xff] %vm57, %v1031
  %v1034 = vld [vmem:[#allocation2 + $0x40] sm:$0xff]
  %v1035 = vsel %vm57, %v1026, 0
  %1037 = vmatprep.subr.mxu0 0.0
  %1038 = vmatpush1.msra.mxu0 0.0
  %1039 = vmatprep.subr.mxu0 0.0
  %1040 = vmatpush1.msra.mxu0 0.0
  %1041 = vmatprep.subr.mxu0 0.0
  %1042 = vmatpush1.msra.mxu0 0.0
  %1043 = vmatprep.subr.mxu0 0.0
  %1044 = vmatpush1.msra.mxu0 0.0
  %1045 = vmatprep.subr.mxu0 0.0
  %1046 = vmatpush1.msra.mxu0 0.0
  %1047 = vmatprep.subr.mxu0 0.0
  %1048 = vmatpush1.msra.mxu0 0.0
  %1049 = vmatprep.subr.mxu0 0.0
  %1050 = vmatpush1.msra.mxu0 0.0
  %1051 = vmatprep.subr.mxu0 0.0
  %1052 = vmatpush1.msra.mxu0 0.0
  %1053 = vmatprep.subr.mxu0 0.0
  %1054 = vmatpush1.msra.mxu0 0.0
  %1055 = vmatprep.subr.mxu0 0.0
  %1056 = vmatpush1.msra.mxu0 0.0
  %1057 = vmatprep.subr.mxu0 0.0
  %1058 = vmatpush1.msra.mxu0 0.0
  %1059 = vmatprep.subr.mxu0 0.0
  %1060 = vmatpush1.msra.mxu0 0.0
  %1061 = vmatprep.subr.mxu0 0.0
  %1062 = vmatpush1.msra.mxu0 %v214
  %1063 = vmatprep.subr.mxu0 0.0
  %1064 = vmatpush1.msra.mxu0 %v213
  %1065 = vmatprep.subr.mxu0 0.0
  %1066 = vmatpush1.msra.mxu0 %v212
  %1067 = vmatprep.subr.mxu0 0.0
  %1068 = vmatpush1.msra.mxu0 %v211
  %1069 = vmatprep.subr.mxu0 0.0
  %1070 = vmatpush2.msra.mxu0 0.0
  %1071 = vmatprep.subr.mxu0 0.0
  %1072 = vmatpush2.msra.mxu0 0.0
  %1073 = vmatprep.subr.mxu0 0.0
  %1074 = vmatpush2.msra.mxu0 0.0
  %1075 = vmatprep.subr.mxu0 0.0
  %1076 = vmatpush2.msra.mxu0 0.0
  %1077 = vmatprep.subr.mxu0 0.0
  %1078 = vmatpush2.msra.mxu0 0.0
  %1079 = vmatprep.subr.mxu0 0.0
  %1080 = vmatpush2.msra.mxu0 0.0
  %1081 = vmatprep.subr.mxu0 0.0
  %1082 = vmatpush2.msra.mxu0 0.0
  %1083 = vmatprep.subr.mxu0 0.0
  %1084 = vmatpush2.msra.mxu0 0.0
  %1085 = vmatprep.subr.mxu0 0.0
  %1086 = vmatpush2.msra.mxu0 0.0
  %1087 = vmatprep.subr.mxu0 0.0
  %1088 = vmatpush2.msra.mxu0 0.0
  %1089 = vmatprep.subr.mxu0 0.0
  %1090 = vmatpush2.msra.mxu0 0.0
  %1091 = vmatprep.subr.mxu0 0.0
  %1092 = vmatpush2.msra.mxu0 0.0
  %1093 = vmatprep.subr.mxu0 0.0
  %1094 = vmatpush2.msra.mxu0 0.0
  %1095 = vmatprep.subr.mxu0 0.0
  %1096 = vmatpush2.msra.mxu0 0.0
  %1097 = vmatprep.subr.mxu0 0.0
  %1098 = vmatpush2.msra.mxu0 0.0
  %1099 = vmatprep.subr.mxu0 0.0
  %1100 = vmatpush2.msra.mxu0 0.0
  %1101 = vmatprep.mubr.f32.mxu0 0.0
  %1102 = vmatmul.mubr.f32.gmra.mxu0 %v1035
  %v1103 = vpop.f32.mrf.mxu0
  %v1104 = vadd.f32 %v1034, %v1103
  %v1105 = vpop.f32.mrf.mxu0
  %1106 = vdwg.mxu0
  %v1107 = vld [vmem:[#allocation2 + $0x38] sm:$0xff]
  %v1108 = vsel %vm57, %v1031, 0
  %1110 = vmatprep.subr.mxu0 0.0
  %1111 = vmatpush1.msra.mxu0 0.0
  %1112 = vmatprep.subr.mxu0 0.0
  %1113 = vmatpush1.msra.mxu0 0.0
  %1114 = vmatprep.subr.mxu0 0.0
  %1115 = vmatpush1.msra.mxu0 0.0
  %1116 = vmatprep.subr.mxu0 0.0
  %1117 = vmatpush1.msra.mxu0 0.0
  %1118 = vmatprep.subr.mxu0 0.0
  %1119 = vmatpush1.msra.mxu0 0.0
  %1120 = vmatprep.subr.mxu0 0.0
  %1121 = vmatpush1.msra.mxu0 0.0
  %1122 = vmatprep.subr.mxu0 0.0
  %1123 = vmatpush1.msra.mxu0 0.0
  %1124 = vmatprep.subr.mxu0 0.0
  %1125 = vmatpush1.msra.mxu0 0.0
  %1126 = vmatprep.subr.mxu0 0.0
  %1127 = vmatpush1.msra.mxu0 0.0
  %1128 = vmatprep.subr.mxu0 0.0
  %1129 = vmatpush1.msra.mxu0 0.0
  %1130 = vmatprep.subr.mxu0 0.0
  %1131 = vmatpush1.msra.mxu0 0.0
  %1132 = vmatprep.subr.mxu0 0.0
  %1133 = vmatpush1.msra.mxu0 0.0
  %1134 = vmatprep.subr.mxu0 0.0
  %1135 = vmatpush1.msra.mxu0 %v218
  %1136 = vmatprep.subr.mxu0 0.0
  %1137 = vmatpush1.msra.mxu0 %v217
  %1138 = vmatprep.subr.mxu0 0.0
  %1139 = vmatpush1.msra.mxu0 %v216
  %1140 = vmatprep.subr.mxu0 0.0
  %1141 = vmatpush1.msra.mxu0 %v215
  %1142 = vmatprep.subr.mxu0 0.0
  %1143 = vmatpush2.msra.mxu0 0.0
  %1144 = vmatprep.subr.mxu0 0.0
  %1145 = vmatpush2.msra.mxu0 0.0
  %1146 = vmatprep.subr.mxu0 0.0
  %1147 = vmatpush2.msra.mxu0 0.0
  %1148 = vmatprep.subr.mxu0 0.0
  %1149 = vmatpush2.msra.mxu0 0.0
  %1150 = vmatprep.subr.mxu0 0.0
  %1151 = vmatpush2.msra.mxu0 0.0
  %1152 = vmatprep.subr.mxu0 0.0
  %1153 = vmatpush2.msra.mxu0 0.0
  %1154 = vmatprep.subr.mxu0 0.0
  %1155 = vmatpush2.msra.mxu0 0.0
  %1156 = vmatprep.subr.mxu0 0.0
  %1157 = vmatpush2.msra.mxu0 0.0
  %1158 = vmatprep.subr.mxu0 0.0
  %1159 = vmatpush2.msra.mxu0 0.0
  %1160 = vmatprep.subr.mxu0 0.0
  %1161 = vmatpush2.msra.mxu0 0.0
  %1162 = vmatprep.subr.mxu0 0.0
  %1163 = vmatpush2.msra.mxu0 0.0
  %1164 = vmatprep.subr.mxu0 0.0
  %1165 = vmatpush2.msra.mxu0 0.0
  %1166 = vmatprep.subr.mxu0 0.0
  %1167 = vmatpush2.msra.mxu0 0.0
  %1168 = vmatprep.subr.mxu0 0.0
  %1169 = vmatpush2.msra.mxu0 0.0
  %1170 = vmatprep.subr.mxu0 0.0
  %1171 = vmatpush2.msra.mxu0 0.0
  %1172 = vmatprep.subr.mxu0 0.0
  %1173 = vmatpush2.msra.mxu0 0.0
  %1174 = vmatprep.mubr.f32.mxu0 0.0
  %1175 = vmatmul.mubr.f32.gmra.mxu0 %v1108
  %v1176 = vpop.f32.mrf.mxu0
  %v1177 = vadd.f32 %v1107, %v1176
  %v1178 = vpop.f32.mrf.mxu0
  %1179 = vdwg.mxu0
  %v1180 = vxor.u32 %v1104, 2147483648
  %v1181 = vmul.f32 %v1180, 1.442695
  %v1182 = vpow.pop %v1181
  %v1183 = vadd.f32 %v1182, 1.0
  %v1184 = vrcp.pop %v1183
  %v1185 = vmul.f32 1.0, %v1184
  %v1186 = vtanh.pop %v1104
  %v1187 = vmul.f32 %v1185, %v993
  %1189 = vrot.lane.b32.xlu0 %v1186, 64
  %v1190 = vpop.permute.xlu0 %1189
  %v1192 = vmul.f32 %v1185, %v1190
  %1194 = vrot.lane.b32.xlu0 %v1192, 32
  %v1195 = vpop.permute.xlu0 %1194
  %v1197 = vadd.f32 %v1187, %v1195
  %v1198 = vtanh.pop %v1197
  %1200 = vrot.lane.b32.xlu0 %v1198, 64
  %v1201 = vpop.permute.xlu0 %1200
  %v1203 = vmul.f32 %v1185, %v1201
  %v1204 = vxor.u32 %v1177, 2147483648
  %v1205 = vmul.f32 %v1204, 1.442695
  %v1206 = vpow.pop %v1205
  %v1207 = vadd.f32 %v1206, 1.0
  %v1208 = vrcp.pop %v1207
  %v1209 = vmul.f32 1.0, %v1208
  %v1210 = vtanh.pop %v1177
  %v1211 = vmul.f32 %v1209, %v1017
  %1213 = vrot.lane.b32.xlu0 %v1210, 64
  %v1214 = vpop.permute.xlu0 %1213
  %v1216 = vmul.f32 %v1209, %v1214
  %1218 = vrot.lane.b32.xlu0 %v1216, 32
  %v1219 = vpop.permute.xlu0 %1218
  %v1221 = vadd.f32 %v1211, %v1219
  %v1222 = vtanh.pop %v1221
  %1224 = vrot.lane.b32.xlu0 %v1222, 64
  %v1225 = vpop.permute.xlu0 %1224
  %v1227 = vmul.f32 %v1209, %v1225
  %1229 = vrot.lane.b32.xlu0 %v1203, 32
  %v1230 = vpop.permute.xlu0 %1229
  %1232 = vst.msk [vmem:[#allocation3 + $0x20] sm:$0xff] %vm57, %v1230
  %1234 = vrot.lane.b32.xlu0 %v1227, 32
  %v1235 = vpop.permute.xlu0 %1234
  %1237 = vst.msk [vmem:[#allocation4 + $0x18] sm:$0xff] %vm57, %v1235
  %v1238 = vld [vmem:[#allocation2 + $0x50] sm:$0xff]
  %v1239 = vsel %vm57, %v1230, 0
  %1241 = vmatprep.subr.mxu0 0.0
  %1242 = vmatpush1.msra.mxu0 0.0
  %1243 = vmatprep.subr.mxu0 0.0
  %1244 = vmatpush1.msra.mxu0 0.0
  %1245 = vmatprep.subr.mxu0 0.0
  %1246 = vmatpush1.msra.mxu0 0.0
  %1247 = vmatprep.subr.mxu0 0.0
  %1248 = vmatpush1.msra.mxu0 0.0
  %1249 = vmatprep.subr.mxu0 0.0
  %1250 = vmatpush1.msra.mxu0 0.0
  %1251 = vmatprep.subr.mxu0 0.0
  %1252 = vmatpush1.msra.mxu0 0.0
  %1253 = vmatprep.subr.mxu0 0.0
  %1254 = vmatpush1.msra.mxu0 0.0
  %1255 = vmatprep.subr.mxu0 0.0
  %1256 = vmatpush1.msra.mxu0 0.0
  %1257 = vmatprep.subr.mxu0 0.0
  %1258 = vmatpush1.msra.mxu0 0.0
  %1259 = vmatprep.subr.mxu0 0.0
  %1260 = vmatpush1.msra.mxu0 0.0
  %1261 = vmatprep.subr.mxu0 0.0
  %1262 = vmatpush1.msra.mxu0 0.0
  %1263 = vmatprep.subr.mxu0 0.0
  %1264 = vmatpush1.msra.mxu0 0.0
  %1265 = vmatprep.subr.mxu0 0.0
  %1266 = vmatpush1.msra.mxu0 %v214
  %1267 = vmatprep.subr.mxu0 0.0
  %1268 = vmatpush1.msra.mxu0 %v213
  %1269 = vmatprep.subr.mxu0 0.0
  %1270 = vmatpush1.msra.mxu0 %v212
  %1271 = vmatprep.subr.mxu0 0.0
  %1272 = vmatpush1.msra.mxu0 %v211
  %1273 = vmatprep.subr.mxu0 0.0
  %1274 = vmatpush2.msra.mxu0 0.0
  %1275 = vmatprep.subr.mxu0 0.0
  %1276 = vmatpush2.msra.mxu0 0.0
  %1277 = vmatprep.subr.mxu0 0.0
  %1278 = vmatpush2.msra.mxu0 0.0
  %1279 = vmatprep.subr.mxu0 0.0
  %1280 = vmatpush2.msra.mxu0 0.0
  %1281 = vmatprep.subr.mxu0 0.0
  %1282 = vmatpush2.msra.mxu0 0.0
  %1283 = vmatprep.subr.mxu0 0.0
  %1284 = vmatpush2.msra.mxu0 0.0
  %1285 = vmatprep.subr.mxu0 0.0
  %1286 = vmatpush2.msra.mxu0 0.0
  %1287 = vmatprep.subr.mxu0 0.0
  %1288 = vmatpush2.msra.mxu0 0.0
  %1289 = vmatprep.subr.mxu0 0.0
  %1290 = vmatpush2.msra.mxu0 0.0
  %1291 = vmatprep.subr.mxu0 0.0
  %1292 = vmatpush2.msra.mxu0 0.0
  %1293 = vmatprep.subr.mxu0 0.0
  %1294 = vmatpush2.msra.mxu0 0.0
  %1295 = vmatprep.subr.mxu0 0.0
  %1296 = vmatpush2.msra.mxu0 0.0
  %1297 = vmatprep.subr.mxu0 0.0
  %1298 = vmatpush2.msra.mxu0 0.0
  %1299 = vmatprep.subr.mxu0 0.0
  %1300 = vmatpush2.msra.mxu0 0.0
  %1301 = vmatprep.subr.mxu0 0.0
  %1302 = vmatpush2.msra.mxu0 0.0
  %1303 = vmatprep.subr.mxu0 0.0
  %1304 = vmatpush2.msra.mxu0 0.0
  %1305 = vmatprep.mubr.f32.mxu0 0.0
  %1306 = vmatmul.mubr.f32.gmra.mxu0 %v1239
  %v1307 = vpop.f32.mrf.mxu0
  %v1308 = vadd.f32 %v1238, %v1307
  %v1309 = vpop.f32.mrf.mxu0
  %1310 = vdwg.mxu0
  %v1311 = vld [vmem:[#allocation2 + $0x28] sm:$0xff]
  %v1312 = vsel %vm57, %v1235, 0
  %1314 = vmatprep.subr.mxu0 0.0
  %1315 = vmatpush1.msra.mxu0 0.0
  %1316 = vmatprep.subr.mxu0 0.0
  %1317 = vmatpush1.msra.mxu0 0.0
  %1318 = vmatprep.subr.mxu0 0.0
  %1319 = vmatpush1.msra.mxu0 0.0
  %1320 = vmatprep.subr.mxu0 0.0
  %1321 = vmatpush1.msra.mxu0 0.0
  %1322 = vmatprep.subr.mxu0 0.0
  %1323 = vmatpush1.msra.mxu0 0.0
  %1324 = vmatprep.subr.mxu0 0.0
  %1325 = vmatpush1.msra.mxu0 0.0
  %1326 = vmatprep.subr.mxu0 0.0
  %1327 = vmatpush1.msra.mxu0 0.0
  %1328 = vmatprep.subr.mxu0 0.0
  %1329 = vmatpush1.msra.mxu0 0.0
  %1330 = vmatprep.subr.mxu0 0.0
  %1331 = vmatpush1.msra.mxu0 0.0
  %1332 = vmatprep.subr.mxu0 0.0
  %1333 = vmatpush1.msra.mxu0 0.0
  %1334 = vmatprep.subr.mxu0 0.0
  %1335 = vmatpush1.msra.mxu0 0.0
  %1336 = vmatprep.subr.mxu0 0.0
  %1337 = vmatpush1.msra.mxu0 0.0
  %1338 = vmatprep.subr.mxu0 0.0
  %1339 = vmatpush1.msra.mxu0 %v218
  %1340 = vmatprep.subr.mxu0 0.0
  %1341 = vmatpush1.msra.mxu0 %v217
  %1342 = vmatprep.subr.mxu0 0.0
  %1343 = vmatpush1.msra.mxu0 %v216
  %1344 = vmatprep.subr.mxu0 0.0
  %1345 = vmatpush1.msra.mxu0 %v215
  %1346 = vmatprep.subr.mxu0 0.0
  %1347 = vmatpush2.msra.mxu0 0.0
  %1348 = vmatprep.subr.mxu0 0.0
  %1349 = vmatpush2.msra.mxu0 0.0
  %1350 = vmatprep.subr.mxu0 0.0
  %1351 = vmatpush2.msra.mxu0 0.0
  %1352 = vmatprep.subr.mxu0 0.0
  %1353 = vmatpush2.msra.mxu0 0.0
  %1354 = vmatprep.subr.mxu0 0.0
  %1355 = vmatpush2.msra.mxu0 0.0
  %1356 = vmatprep.subr.mxu0 0.0
  %1357 = vmatpush2.msra.mxu0 0.0
  %1358 = vmatprep.subr.mxu0 0.0
  %1359 = vmatpush2.msra.mxu0 0.0
  %1360 = vmatprep.subr.mxu0 0.0
  %1361 = vmatpush2.msra.mxu0 0.0
  %1362 = vmatprep.subr.mxu0 0.0
  %1363 = vmatpush2.msra.mxu0 0.0
  %1364 = vmatprep.subr.mxu0 0.0
  %1365 = vmatpush2.msra.mxu0 0.0
  %1366 = vmatprep.subr.mxu0 0.0
  %1367 = vmatpush2.msra.mxu0 0.0
  %1368 = vmatprep.subr.mxu0 0.0
  %1369 = vmatpush2.msra.mxu0 0.0
  %1370 = vmatprep.subr.mxu0 0.0
  %1371 = vmatpush2.msra.mxu0 0.0
  %1372 = vmatprep.subr.mxu0 0.0
  %1373 = vmatpush2.msra.mxu0 0.0
  %1374 = vmatprep.subr.mxu0 0.0
  %1375 = vmatpush2.msra.mxu0 0.0
  %1376 = vmatprep.subr.mxu0 0.0
  %1377 = vmatpush2.msra.mxu0 0.0
  %1378 = vmatprep.mubr.f32.mxu0 0.0
  %1379 = vmatmul.mubr.f32.gmra.mxu0 %v1312
  %v1380 = vpop.f32.mrf.mxu0
  %v1381 = vadd.f32 %v1311, %v1380
  %v1382 = vpop.f32.mrf.mxu0
  %1383 = vdwg.mxu0
  %v1384 = vxor.u32 %v1308, 2147483648
  %v1385 = vmul.f32 %v1384, 1.442695
  %v1386 = vpow.pop %v1385
  %v1387 = vadd.f32 %v1386, 1.0
  %v1388 = vrcp.pop %v1387
  %v1389 = vmul.f32 1.0, %v1388
  %v1390 = vtanh.pop %v1308
  %v1391 = vmul.f32 %v1389, %v1197
  %1393 = vrot.lane.b32.xlu0 %v1390, 64
  %v1394 = vpop.permute.xlu0 %1393
  %v1396 = vmul.f32 %v1389, %v1394
  %1398 = vrot.lane.b32.xlu0 %v1396, 32
  %v1399 = vpop.permute.xlu0 %1398
  %v1401 = vadd.f32 %v1391, %v1399
  %v1402 = vtanh.pop %v1401
  %1404 = vrot.lane.b32.xlu0 %v1402, 64
  %v1405 = vpop.permute.xlu0 %1404
  %v1407 = vmul.f32 %v1389, %v1405
  %v1408 = vxor.u32 %v1381, 2147483648
  %v1409 = vmul.f32 %v1408, 1.442695
  %v1410 = vpow.pop %v1409
  %v1411 = vadd.f32 %v1410, 1.0
  %v1412 = vrcp.pop %v1411
  %v1413 = vmul.f32 1.0, %v1412
  %v1414 = vtanh.pop %v1381
  %v1415 = vmul.f32 %v1413, %v1221
  %1417 = vrot.lane.b32.xlu0 %v1414, 64
  %v1418 = vpop.permute.xlu0 %1417
  %v1420 = vmul.f32 %v1413, %v1418
  %1422 = vrot.lane.b32.xlu0 %v1420, 32
  %v1423 = vpop.permute.xlu0 %1422
  %v1425 = vadd.f32 %v1415, %v1423
  %v1426 = vtanh.pop %v1425
  %1428 = vrot.lane.b32.xlu0 %v1426, 64
  %v1429 = vpop.permute.xlu0 %1428
  %v1431 = vmul.f32 %v1413, %v1429
  %1433 = vrot.lane.b32.xlu0 %v1407, 32
  %v1434 = vpop.permute.xlu0 %1433
  %1436 = vst.msk [vmem:[#allocation3 + $0x28] sm:$0xff] %vm57, %v1434
  %1438 = vrot.lane.b32.xlu0 %v1431, 32
  %v1439 = vpop.permute.xlu0 %1438
  %1441 = vst.msk [vmem:[#allocation4 + $0x10] sm:$0xff] %vm57, %v1439
  %v1442 = vld [vmem:[#allocation2 + $0x60] sm:$0xff]
  %v1443 = vsel %vm57, %v1434, 0
  %1445 = vmatprep.subr.mxu0 0.0
  %1446 = vmatpush1.msra.mxu0 0.0
  %1447 = vmatprep.subr.mxu0 0.0
  %1448 = vmatpush1.msra.mxu0 0.0
  %1449 = vmatprep.subr.mxu0 0.0
  %1450 = vmatpush1.msra.mxu0 0.0
  %1451 = vmatprep.subr.mxu0 0.0
  %1452 = vmatpush1.msra.mxu0 0.0
  %1453 = vmatprep.subr.mxu0 0.0
  %1454 = vmatpush1.msra.mxu0 0.0
  %1455 = vmatprep.subr.mxu0 0.0
  %1456 = vmatpush1.msra.mxu0 0.0
  %1457 = vmatprep.subr.mxu0 0.0
  %1458 = vmatpush1.msra.mxu0 0.0
  %1459 = vmatprep.subr.mxu0 0.0
  %1460 = vmatpush1.msra.mxu0 0.0
  %1461 = vmatprep.subr.mxu0 0.0
  %1462 = vmatpush1.msra.mxu0 0.0
  %1463 = vmatprep.subr.mxu0 0.0
  %1464 = vmatpush1.msra.mxu0 0.0
  %1465 = vmatprep.subr.mxu0 0.0
  %1466 = vmatpush1.msra.mxu0 0.0
  %1467 = vmatprep.subr.mxu0 0.0
  %1468 = vmatpush1.msra.mxu0 0.0
  %1469 = vmatprep.subr.mxu0 0.0
  %1470 = vmatpush1.msra.mxu0 %v214
  %1471 = vmatprep.subr.mxu0 0.0
  %1472 = vmatpush1.msra.mxu0 %v213
  %1473 = vmatprep.subr.mxu0 0.0
  %1474 = vmatpush1.msra.mxu0 %v212
  %1475 = vmatprep.subr.mxu0 0.0
  %1476 = vmatpush1.msra.mxu0 %v211
  %1477 = vmatprep.subr.mxu0 0.0
  %1478 = vmatpush2.msra.mxu0 0.0
  %1479 = vmatprep.subr.mxu0 0.0
  %1480 = vmatpush2.msra.mxu0 0.0
  %1481 = vmatprep.subr.mxu0 0.0
  %1482 = vmatpush2.msra.mxu0 0.0
  %1483 = vmatprep.subr.mxu0 0.0
  %1484 = vmatpush2.msra.mxu0 0.0
  %1485 = vmatprep.subr.mxu0 0.0
  %1486 = vmatpush2.msra.mxu0 0.0
  %1487 = vmatprep.subr.mxu0 0.0
  %1488 = vmatpush2.msra.mxu0 0.0
  %1489 = vmatprep.subr.mxu0 0.0
  %1490 = vmatpush2.msra.mxu0 0.0
  %1491 = vmatprep.subr.mxu0 0.0
  %1492 = vmatpush2.msra.mxu0 0.0
  %1493 = vmatprep.subr.mxu0 0.0
  %1494 = vmatpush2.msra.mxu0 0.0
  %1495 = vmatprep.subr.mxu0 0.0
  %1496 = vmatpush2.msra.mxu0 0.0
  %1497 = vmatprep.subr.mxu0 0.0
  %1498 = vmatpush2.msra.mxu0 0.0
  %1499 = vmatprep.subr.mxu0 0.0
  %1500 = vmatpush2.msra.mxu0 0.0
  %1501 = vmatprep.subr.mxu0 0.0
  %1502 = vmatpush2.msra.mxu0 0.0
  %1503 = vmatprep.subr.mxu0 0.0
  %1504 = vmatpush2.msra.mxu0 0.0
  %1505 = vmatprep.subr.mxu0 0.0
  %1506 = vmatpush2.msra.mxu0 0.0
  %1507 = vmatprep.subr.mxu0 0.0
  %1508 = vmatpush2.msra.mxu0 0.0
  %1509 = vmatprep.mubr.f32.mxu0 0.0
  %1510 = vmatmul.mubr.f32.gmra.mxu0 %v1443
  %v1511 = vpop.f32.mrf.mxu0
  %v1512 = vadd.f32 %v1442, %v1511
  %v1513 = vpop.f32.mrf.mxu0
  %1514 = vdwg.mxu0
  %v1515 = vld [vmem:[#allocation2 + $0x18] sm:$0xff]
  %v1516 = vsel %vm57, %v1439, 0
  %1518 = vmatprep.subr.mxu0 0.0
  %1519 = vmatpush1.msra.mxu0 0.0
  %1520 = vmatprep.subr.mxu0 0.0
  %1521 = vmatpush1.msra.mxu0 0.0
  %1522 = vmatprep.subr.mxu0 0.0
  %1523 = vmatpush1.msra.mxu0 0.0
  %1524 = vmatprep.subr.mxu0 0.0
  %1525 = vmatpush1.msra.mxu0 0.0
  %1526 = vmatprep.subr.mxu0 0.0
  %1527 = vmatpush1.msra.mxu0 0.0
  %1528 = vmatprep.subr.mxu0 0.0
  %1529 = vmatpush1.msra.mxu0 0.0
  %1530 = vmatprep.subr.mxu0 0.0
  %1531 = vmatpush1.msra.mxu0 0.0
  %1532 = vmatprep.subr.mxu0 0.0
  %1533 = vmatpush1.msra.mxu0 0.0
  %1534 = vmatprep.subr.mxu0 0.0
  %1535 = vmatpush1.msra.mxu0 0.0
  %1536 = vmatprep.subr.mxu0 0.0
  %1537 = vmatpush1.msra.mxu0 0.0
  %1538 = vmatprep.subr.mxu0 0.0
  %1539 = vmatpush1.msra.mxu0 0.0
  %1540 = vmatprep.subr.mxu0 0.0
  %1541 = vmatpush1.msra.mxu0 0.0
  %1542 = vmatprep.subr.mxu0 0.0
  %1543 = vmatpush1.msra.mxu0 %v218
  %1544 = vmatprep.subr.mxu0 0.0
  %1545 = vmatpush1.msra.mxu0 %v217
  %1546 = vmatprep.subr.mxu0 0.0
  %1547 = vmatpush1.msra.mxu0 %v216
  %1548 = vmatprep.subr.mxu0 0.0
  %1549 = vmatpush1.msra.mxu0 %v215
  %1550 = vmatprep.subr.mxu0 0.0
  %1551 = vmatpush2.msra.mxu0 0.0
  %1552 = vmatprep.subr.mxu0 0.0
  %1553 = vmatpush2.msra.mxu0 0.0
  %1554 = vmatprep.subr.mxu0 0.0
  %1555 = vmatpush2.msra.mxu0 0.0
  %1556 = vmatprep.subr.mxu0 0.0
  %1557 = vmatpush2.msra.mxu0 0.0
  %1558 = vmatprep.subr.mxu0 0.0
  %1559 = vmatpush2.msra.mxu0 0.0
  %1560 = vmatprep.subr.mxu0 0.0
  %1561 = vmatpush2.msra.mxu0 0.0
  %1562 = vmatprep.subr.mxu0 0.0
  %1563 = vmatpush2.msra.mxu0 0.0
  %1564 = vmatprep.subr.mxu0 0.0
  %1565 = vmatpush2.msra.mxu0 0.0
  %1566 = vmatprep.subr.mxu0 0.0
  %1567 = vmatpush2.msra.mxu0 0.0
  %1568 = vmatprep.subr.mxu0 0.0
  %1569 = vmatpush2.msra.mxu0 0.0
  %1570 = vmatprep.subr.mxu0 0.0
  %1571 = vmatpush2.msra.mxu0 0.0
  %1572 = vmatprep.subr.mxu0 0.0
  %1573 = vmatpush2.msra.mxu0 0.0
  %1574 = vmatprep.subr.mxu0 0.0
  %1575 = vmatpush2.msra.mxu0 0.0
  %1576 = vmatprep.subr.mxu0 0.0
  %1577 = vmatpush2.msra.mxu0 0.0
  %1578 = vmatprep.subr.mxu0 0.0
  %1579 = vmatpush2.msra.mxu0 0.0
  %1580 = vmatprep.subr.mxu0 0.0
  %1581 = vmatpush2.msra.mxu0 0.0
  %1582 = vmatprep.mubr.f32.mxu0 0.0
  %1583 = vmatmul.mubr.f32.gmra.mxu0 %v1516
  %v1584 = vpop.f32.mrf.mxu0
  %v1585 = vadd.f32 %v1515, %v1584
  %v1586 = vpop.f32.mrf.mxu0
  %1587 = vdwg.mxu0
  %v1588 = vxor.u32 %v1512, 2147483648
  %v1589 = vmul.f32 %v1588, 1.442695
  %v1590 = vpow.pop %v1589
  %v1591 = vadd.f32 %v1590, 1.0
  %v1592 = vrcp.pop %v1591
  %v1593 = vmul.f32 1.0, %v1592
  %v1594 = vtanh.pop %v1512
  %v1595 = vmul.f32 %v1593, %v1401
  %1597 = vrot.lane.b32.xlu0 %v1594, 64
  %v1598 = vpop.permute.xlu0 %1597
  %v1600 = vmul.f32 %v1593, %v1598
  %1602 = vrot.lane.b32.xlu0 %v1600, 32
  %v1603 = vpop.permute.xlu0 %1602
  %v1605 = vadd.f32 %v1595, %v1603
  %v1606 = vtanh.pop %v1605
  %1608 = vrot.lane.b32.xlu0 %v1606, 64
  %v1609 = vpop.permute.xlu0 %1608
  %v1611 = vmul.f32 %v1593, %v1609
  %v1612 = vxor.u32 %v1585, 2147483648
  %v1613 = vmul.f32 %v1612, 1.442695
  %v1614 = vpow.pop %v1613
  %v1615 = vadd.f32 %v1614, 1.0
  %v1616 = vrcp.pop %v1615
  %v1617 = vmul.f32 1.0, %v1616
  %v1618 = vtanh.pop %v1585
  %v1619 = vmul.f32 %v1617, %v1425
  %1621 = vrot.lane.b32.xlu0 %v1618, 64
  %v1622 = vpop.permute.xlu0 %1621
  %v1624 = vmul.f32 %v1617, %v1622
  %1626 = vrot.lane.b32.xlu0 %v1624, 32
  %v1627 = vpop.permute.xlu0 %1626
  %v1629 = vadd.f32 %v1619, %v1627
  %v1630 = vtanh.pop %v1629
  %1632 = vrot.lane.b32.xlu0 %v1630, 64
  %v1633 = vpop.permute.xlu0 %1632
  %v1635 = vmul.f32 %v1617, %v1633
  %1637 = vrot.lane.b32.xlu0 %v1611, 32
  %v1638 = vpop.permute.xlu0 %1637
  %1640 = vst.msk [vmem:[#allocation3 + $0x30] sm:$0xff] %vm57, %v1638
  %1642 = vrot.lane.b32.xlu0 %v1635, 32
  %v1643 = vpop.permute.xlu0 %1642
  %1645 = vst.msk [vmem:[#allocation4 + $0x8] sm:$0xff] %vm57, %v1643
  %v1646 = vld [vmem:[#allocation2 + $0x70] sm:$0xff]
  %v1647 = vsel %vm57, %v1638, 0
  %1649 = vmatprep.subr.mxu0 0.0
  %1650 = vmatpush1.msra.mxu0 0.0
  %1651 = vmatprep.subr.mxu0 0.0
  %1652 = vmatpush1.msra.mxu0 0.0
  %1653 = vmatprep.subr.mxu0 0.0
  %1654 = vmatpush1.msra.mxu0 0.0
  %1655 = vmatprep.subr.mxu0 0.0
  %1656 = vmatpush1.msra.mxu0 0.0
  %1657 = vmatprep.subr.mxu0 0.0
  %1658 = vmatpush1.msra.mxu0 0.0
  %1659 = vmatprep.subr.mxu0 0.0
  %1660 = vmatpush1.msra.mxu0 0.0
  %1661 = vmatprep.subr.mxu0 0.0
  %1662 = vmatpush1.msra.mxu0 0.0
  %1663 = vmatprep.subr.mxu0 0.0
  %1664 = vmatpush1.msra.mxu0 0.0
  %1665 = vmatprep.subr.mxu0 0.0
  %1666 = vmatpush1.msra.mxu0 0.0
  %1667 = vmatprep.subr.mxu0 0.0
  %1668 = vmatpush1.msra.mxu0 0.0
  %1669 = vmatprep.subr.mxu0 0.0
  %1670 = vmatpush1.msra.mxu0 0.0
  %1671 = vmatprep.subr.mxu0 0.0
  %1672 = vmatpush1.msra.mxu0 0.0
  %1673 = vmatprep.subr.mxu0 0.0
  %1674 = vmatpush1.msra.mxu0 %v214
  %1675 = vmatprep.subr.mxu0 0.0
  %1676 = vmatpush1.msra.mxu0 %v213
  %1677 = vmatprep.subr.mxu0 0.0
  %1678 = vmatpush1.msra.mxu0 %v212
  %1679 = vmatprep.subr.mxu0 0.0
  %1680 = vmatpush1.msra.mxu0 %v211
  %1681 = vmatprep.subr.mxu0 0.0
  %1682 = vmatpush2.msra.mxu0 0.0
  %1683 = vmatprep.subr.mxu0 0.0
  %1684 = vmatpush2.msra.mxu0 0.0
  %1685 = vmatprep.subr.mxu0 0.0
  %1686 = vmatpush2.msra.mxu0 0.0
  %1687 = vmatprep.subr.mxu0 0.0
  %1688 = vmatpush2.msra.mxu0 0.0
  %1689 = vmatprep.subr.mxu0 0.0
  %1690 = vmatpush2.msra.mxu0 0.0
  %1691 = vmatprep.subr.mxu0 0.0
  %1692 = vmatpush2.msra.mxu0 0.0
  %1693 = vmatprep.subr.mxu0 0.0
  %1694 = vmatpush2.msra.mxu0 0.0
  %1695 = vmatprep.subr.mxu0 0.0
  %1696 = vmatpush2.msra.mxu0 0.0
  %1697 = vmatprep.subr.mxu0 0.0
  %1698 = vmatpush2.msra.mxu0 0.0
  %1699 = vmatprep.subr.mxu0 0.0
  %1700 = vmatpush2.msra.mxu0 0.0
  %1701 = vmatprep.subr.mxu0 0.0
  %1702 = vmatpush2.msra.mxu0 0.0
  %1703 = vmatprep.subr.mxu0 0.0
  %1704 = vmatpush2.msra.mxu0 0.0
  %1705 = vmatprep.subr.mxu0 0.0
  %1706 = vmatpush2.msra.mxu0 0.0
  %1707 = vmatprep.subr.mxu0 0.0
  %1708 = vmatpush2.msra.mxu0 0.0
  %1709 = vmatprep.subr.mxu0 0.0
  %1710 = vmatpush2.msra.mxu0 0.0
  %1711 = vmatprep.subr.mxu0 0.0
  %1712 = vmatpush2.msra.mxu0 0.0
  %1713 = vmatprep.mubr.f32.mxu0 0.0
  %1714 = vmatmul.mubr.f32.gmra.mxu0 %v1647
  %v1715 = vpop.f32.mrf.mxu0
  %v1716 = vadd.f32 %v1646, %v1715
  %v1717 = vpop.f32.mrf.mxu0
  %1718 = vdwg.mxu0
  %v1719 = vld [vmem:[#allocation2 + $0x8] sm:$0xff]
  %v1720 = vsel %vm57, %v1643, 0
  %1722 = vmatprep.subr.mxu0 0.0
  %1723 = vmatpush1.msra.mxu0 0.0
  %1724 = vmatprep.subr.mxu0 0.0
  %1725 = vmatpush1.msra.mxu0 0.0
  %1726 = vmatprep.subr.mxu0 0.0
  %1727 = vmatpush1.msra.mxu0 0.0
  %1728 = vmatprep.subr.mxu0 0.0
  %1729 = vmatpush1.msra.mxu0 0.0
  %1730 = vmatprep.subr.mxu0 0.0
  %1731 = vmatpush1.msra.mxu0 0.0
  %1732 = vmatprep.subr.mxu0 0.0
  %1733 = vmatpush1.msra.mxu0 0.0
  %1734 = vmatprep.subr.mxu0 0.0
  %1735 = vmatpush1.msra.mxu0 0.0
  %1736 = vmatprep.subr.mxu0 0.0
  %1737 = vmatpush1.msra.mxu0 0.0
  %1738 = vmatprep.subr.mxu0 0.0
  %1739 = vmatpush1.msra.mxu0 0.0
  %1740 = vmatprep.subr.mxu0 0.0
  %1741 = vmatpush1.msra.mxu0 0.0
  %1742 = vmatprep.subr.mxu0 0.0
  %1743 = vmatpush1.msra.mxu0 0.0
  %1744 = vmatprep.subr.mxu0 0.0
  %1745 = vmatpush1.msra.mxu0 0.0
  %1746 = vmatprep.subr.mxu0 0.0
  %1747 = vmatpush1.msra.mxu0 %v218
  %1748 = vmatprep.subr.mxu0 0.0
  %1749 = vmatpush1.msra.mxu0 %v217
  %1750 = vmatprep.subr.mxu0 0.0
  %1751 = vmatpush1.msra.mxu0 %v216
  %1752 = vmatprep.subr.mxu0 0.0
  %1753 = vmatpush1.msra.mxu0 %v215
  %1754 = vmatprep.subr.mxu0 0.0
  %1755 = vmatpush2.msra.mxu0 0.0
  %1756 = vmatprep.subr.mxu0 0.0
  %1757 = vmatpush2.msra.mxu0 0.0
  %1758 = vmatprep.subr.mxu0 0.0
  %1759 = vmatpush2.msra.mxu0 0.0
  %1760 = vmatprep.subr.mxu0 0.0
  %1761 = vmatpush2.msra.mxu0 0.0
  %1762 = vmatprep.subr.mxu0 0.0
  %1763 = vmatpush2.msra.mxu0 0.0
  %1764 = vmatprep.subr.mxu0 0.0
  %1765 = vmatpush2.msra.mxu0 0.0
  %1766 = vmatprep.subr.mxu0 0.0
  %1767 = vmatpush2.msra.mxu0 0.0
  %1768 = vmatprep.subr.mxu0 0.0
  %1769 = vmatpush2.msra.mxu0 0.0
  %1770 = vmatprep.subr.mxu0 0.0
  %1771 = vmatpush2.msra.mxu0 0.0
  %1772 = vmatprep.subr.mxu0 0.0
  %1773 = vmatpush2.msra.mxu0 0.0
  %1774 = vmatprep.subr.mxu0 0.0
  %1775 = vmatpush2.msra.mxu0 0.0
  %1776 = vmatprep.subr.mxu0 0.0
  %1777 = vmatpush2.msra.mxu0 0.0
  %1778 = vmatprep.subr.mxu0 0.0
  %1779 = vmatpush2.msra.mxu0 0.0
  %1780 = vmatprep.subr.mxu0 0.0
  %1781 = vmatpush2.msra.mxu0 0.0
  %1782 = vmatprep.subr.mxu0 0.0
  %1783 = vmatpush2.msra.mxu0 0.0
  %1784 = vmatprep.subr.mxu0 0.0
  %1785 = vmatpush2.msra.mxu0 0.0
  %1786 = vmatprep.mubr.f32.mxu0 0.0
  %1787 = vmatmul.mubr.f32.gmra.mxu0 %v1720
  %v1788 = vpop.f32.mrf.mxu0
  %v1789 = vadd.f32 %v1719, %v1788
  %v1790 = vpop.f32.mrf.mxu0
  %1791 = vdwg.mxu0
  %v1792 = vxor.u32 %v1716, 2147483648
  %v1793 = vmul.f32 %v1792, 1.442695
  %v1794 = vpow.pop %v1793
  %v1795 = vadd.f32 %v1794, 1.0
  %v1796 = vrcp.pop %v1795
  %v1797 = vmul.f32 1.0, %v1796
  %v1798 = vtanh.pop %v1716
  %v1799 = vmul.f32 %v1797, %v1605
  %1801 = vrot.lane.b32.xlu0 %v1798, 64
  %v1802 = vpop.permute.xlu0 %1801
  %v1804 = vmul.f32 %v1797, %v1802
  %1806 = vrot.lane.b32.xlu0 %v1804, 32
  %v1807 = vpop.permute.xlu0 %1806
  %v1809 = vadd.f32 %v1799, %v1807
  %v1810 = vtanh.pop %v1809
  %1812 = vrot.lane.b32.xlu0 %v1810, 64
  %v1813 = vpop.permute.xlu0 %1812
  %v1815 = vmul.f32 %v1797, %v1813
  %v1816 = vxor.u32 %v1789, 2147483648
  %v1817 = vmul.f32 %v1816, 1.442695
  %v1818 = vpow.pop %v1817
  %v1819 = vadd.f32 %v1818, 1.0
  %v1820 = vrcp.pop %v1819
  %v1821 = vmul.f32 1.0, %v1820
  %v1822 = vtanh.pop %v1789
  %v1823 = vmul.f32 %v1821, %v1629
  %1825 = vrot.lane.b32.xlu0 %v1822, 64
  %v1826 = vpop.permute.xlu0 %1825
  %v1828 = vmul.f32 %v1821, %v1826
  %1830 = vrot.lane.b32.xlu0 %v1828, 32
  %v1831 = vpop.permute.xlu0 %1830
  %v1833 = vadd.f32 %v1823, %v1831
  %v1834 = vtanh.pop %v1833
  %1836 = vrot.lane.b32.xlu0 %v1834, 64
  %v1837 = vpop.permute.xlu0 %1836
  %v1839 = vmul.f32 %v1821, %v1837
  %1841 = vrot.lane.b32.xlu0 %v1815, 32
  %v1842 = vpop.permute.xlu0 %1841
  %1844 = vst.msk [vmem:[#allocation3 + $0x38] sm:$0xff] %vm57, %v1842
  %1846 = vrot.lane.b32.xlu0 %v1839, 32
  %v1847 = vpop.permute.xlu0 %1846
  %1849 = vst.msk [vmem:[#allocation4] sm:$0xff] %vm57, %v1847
  %v1850 = vld [vmem:[#allocation3] sm:$0xff]
  %v1851 = vld [vmem:[#allocation3 + $0x8] sm:$0xff]
  %v1852 = vld [vmem:[#allocation3 + $0x10] sm:$0xff]
  %v1853 = vld [vmem:[#allocation3 + $0x18] sm:$0xff]
  %v1854 = vld [vmem:[#allocation3 + $0x20] sm:$0xff]
  %v1855 = vld [vmem:[#allocation3 + $0x28] sm:$0xff]
  %v1856 = vld [vmem:[#allocation3 + $0x30] sm:$0xff]
  %v1857 = vld [vmem:[#allocation3 + $0x38] sm:$0xff]
  %v1858 = vld [vmem:[%s5] sm:$0xff]
  %v1859 = vld [vmem:[%s5 + $0x8] sm:$0xff]
  %v1860 = vld [vmem:[%s5 + $0x10] sm:$0xff]
  %v1861 = vld [vmem:[%s5 + $0x18] sm:$0xff]
  %v1862 = vld [vmem:[#allocation4] sm:$0xff]
  %v1863 = vld [vmem:[#allocation4 + $0x8] sm:$0xff]
  %v1864 = vld [vmem:[#allocation4 + $0x10] sm:$0xff]
  %v1865 = vld [vmem:[#allocation4 + $0x18] sm:$0xff]
  %v1866 = vld [vmem:[#allocation4 + $0x20] sm:$0xff]
  %v1867 = vld [vmem:[#allocation4 + $0x28] sm:$0xff]
  %v1868 = vld [vmem:[#allocation4 + $0x30] sm:$0xff]
  %v1869 = vld [vmem:[#allocation4 + $0x38] sm:$0xff]
  %v1870 = vld [vmem:[%s6] sm:$0xff]
  %v1871 = vld [vmem:[%s6 + $0x8] sm:$0xff]
  %v1872 = vld [vmem:[%s6 + $0x10] sm:$0xff]
  %v1873 = vld [vmem:[%s6 + $0x18] sm:$0xff]
  %v1875 = vsel %vm57, %v1862, 0
  %v1878 = vsel %vm57, %v1863, 0
  %v1881 = vsel %vm57, %v1864, 0
  %v1884 = vsel %vm57, %v1865, 0
  %v1887 = vsel %vm57, %v1866, 0
  %v1890 = vsel %vm57, %v1867, 0
  %v1893 = vsel %vm57, %v1868, 0
  %v1896 = vsel %vm57, %v1869, 0
  %1898 = vmatprep.subr.mxu0 0.0
  %1899 = vmatpush1.msra.mxu0 0.0
  %1900 = vmatprep.subr.mxu0 0.0
  %1901 = vmatpush1.msra.mxu0 0.0
  %1902 = vmatprep.subr.mxu0 0.0
  %1903 = vmatpush1.msra.mxu0 0.0
  %1904 = vmatprep.subr.mxu0 0.0
  %1905 = vmatpush1.msra.mxu0 0.0
  %1906 = vmatprep.subr.mxu0 0.0
  %1907 = vmatpush1.msra.mxu0 0.0
  %1908 = vmatprep.subr.mxu0 0.0
  %1909 = vmatpush1.msra.mxu0 0.0
  %1910 = vmatprep.subr.mxu0 0.0
  %1911 = vmatpush1.msra.mxu0 0.0
  %1912 = vmatprep.subr.mxu0 0.0
  %1913 = vmatpush1.msra.mxu0 0.0
  %1914 = vmatprep.subr.mxu0 0.0
  %1915 = vmatpush1.msra.mxu0 0.0
  %1916 = vmatprep.subr.mxu0 0.0
  %1917 = vmatpush1.msra.mxu0 0.0
  %1918 = vmatprep.subr.mxu0 0.0
  %1919 = vmatpush1.msra.mxu0 0.0
  %1920 = vmatprep.subr.mxu0 0.0
  %1921 = vmatpush1.msra.mxu0 0.0
  %1922 = vmatprep.subr.mxu0 0.0
  %1923 = vmatpush1.msra.mxu0 %v1873
  %1924 = vmatprep.subr.mxu0 0.0
  %1925 = vmatpush1.msra.mxu0 %v1872
  %1926 = vmatprep.subr.mxu0 0.0
  %1927 = vmatpush1.msra.mxu0 %v1871
  %1928 = vmatprep.subr.mxu0 0.0
  %1929 = vmatpush1.msra.mxu0 %v1870
  %1930 = vmatprep.subr.mxu0 0.0
  %1931 = vmatpush2.msra.mxu0 0.0
  %1932 = vmatprep.subr.mxu0 0.0
  %1933 = vmatpush2.msra.mxu0 0.0
  %1934 = vmatprep.subr.mxu0 0.0
  %1935 = vmatpush2.msra.mxu0 0.0
  %1936 = vmatprep.subr.mxu0 0.0
  %1937 = vmatpush2.msra.mxu0 0.0
  %1938 = vmatprep.subr.mxu0 0.0
  %1939 = vmatpush2.msra.mxu0 0.0
  %1940 = vmatprep.subr.mxu0 0.0
  %1941 = vmatpush2.msra.mxu0 0.0
  %1942 = vmatprep.subr.mxu0 0.0
  %1943 = vmatpush2.msra.mxu0 0.0
  %1944 = vmatprep.subr.mxu0 0.0
  %1945 = vmatpush2.msra.mxu0 0.0
  %1946 = vmatprep.subr.mxu0 0.0
  %1947 = vmatpush2.msra.mxu0 0.0
  %1948 = vmatprep.subr.mxu0 0.0
  %1949 = vmatpush2.msra.mxu0 0.0
  %1950 = vmatprep.subr.mxu0 0.0
  %1951 = vmatpush2.msra.mxu0 0.0
  %1952 = vmatprep.subr.mxu0 0.0
  %1953 = vmatpush2.msra.mxu0 0.0
  %1954 = vmatprep.subr.mxu0 0.0
  %1955 = vmatpush2.msra.mxu0 0.0
  %1956 = vmatprep.subr.mxu0 0.0
  %1957 = vmatpush2.msra.mxu0 0.0
  %1958 = vmatprep.subr.mxu0 0.0
  %1959 = vmatpush2.msra.mxu0 0.0
  %1960 = vmatprep.subr.mxu0 0.0
  %1961 = vmatpush2.msra.mxu0 0.0
  %1962 = vmatprep.mubr.f32.mxu0 0.0
  %1963 = vmatmul.mubr.f32.gmra.mxu0 %v1875
  %v1964 = vpop.f32.mrf.mxu0
  %v1965 = vadd.f32 0.0, %v1964
  %v1966 = vpop.f32.mrf.mxu0
  %1967 = vmatprep.mubr.f32.mxu0 0.0
  %1968 = vmatmul.mubr.f32.gmra.mxu0 %v1878
  %v1969 = vpop.f32.mrf.mxu0
  %v1970 = vadd.f32 0.0, %v1969
  %v1971 = vpop.f32.mrf.mxu0
  %1972 = vmatprep.mubr.f32.mxu0 0.0
  %1973 = vmatmul.mubr.f32.gmra.mxu0 %v1881
  %v1974 = vpop.f32.mrf.mxu0
  %v1975 = vadd.f32 0.0, %v1974
  %v1976 = vpop.f32.mrf.mxu0
  %1977 = vmatprep.mubr.f32.mxu0 0.0
  %1978 = vmatmul.mubr.f32.gmra.mxu0 %v1884
  %v1979 = vpop.f32.mrf.mxu0
  %v1980 = vadd.f32 0.0, %v1979
  %v1981 = vpop.f32.mrf.mxu0
  %1982 = vmatprep.mubr.f32.mxu0 0.0
  %1983 = vmatmul.mubr.f32.gmra.mxu0 %v1887
  %v1984 = vpop.f32.mrf.mxu0
  %v1985 = vadd.f32 0.0, %v1984
  %v1986 = vpop.f32.mrf.mxu0
  %1987 = vmatprep.mubr.f32.mxu0 0.0
  %1988 = vmatmul.mubr.f32.gmra.mxu0 %v1890
  %v1989 = vpop.f32.mrf.mxu0
  %v1990 = vadd.f32 0.0, %v1989
  %v1991 = vpop.f32.mrf.mxu0
  %1992 = vmatprep.mubr.f32.mxu0 0.0
  %1993 = vmatmul.mubr.f32.gmra.mxu0 %v1893
  %v1994 = vpop.f32.mrf.mxu0
  %v1995 = vadd.f32 0.0, %v1994
  %v1996 = vpop.f32.mrf.mxu0
  %1997 = vmatprep.mubr.f32.mxu0 0.0
  %1998 = vmatmul.mubr.f32.gmra.mxu0 %v1896
  %v1999 = vpop.f32.mrf.mxu0
  %v2000 = vadd.f32 0.0, %v1999
  %v2001 = vpop.f32.mrf.mxu0
  %2002 = vdwg.mxu0
  %v2004 = vsel %vm57, %v1850, 0
  %v2007 = vsel %vm57, %v1851, 0
  %v2010 = vsel %vm57, %v1852, 0
  %v2013 = vsel %vm57, %v1853, 0
  %v2016 = vsel %vm57, %v1854, 0
  %v2019 = vsel %vm57, %v1855, 0
  %v2022 = vsel %vm57, %v1856, 0
  %v2025 = vsel %vm57, %v1857, 0
  %2027 = vmatprep.subr.mxu0 0.0
  %2028 = vmatpush1.msra.mxu0 0.0
  %2029 = vmatprep.subr.mxu0 0.0
  %2030 = vmatpush1.msra.mxu0 0.0
  %2031 = vmatprep.subr.mxu0 0.0
  %2032 = vmatpush1.msra.mxu0 0.0
  %2033 = vmatprep.subr.mxu0 0.0
  %2034 = vmatpush1.msra.mxu0 0.0
  %2035 = vmatprep.subr.mxu0 0.0
  %2036 = vmatpush1.msra.mxu0 0.0
  %2037 = vmatprep.subr.mxu0 0.0
  %2038 = vmatpush1.msra.mxu0 0.0
  %2039 = vmatprep.subr.mxu0 0.0
  %2040 = vmatpush1.msra.mxu0 0.0
  %2041 = vmatprep.subr.mxu0 0.0
  %2042 = vmatpush1.msra.mxu0 0.0
  %2043 = vmatprep.subr.mxu0 0.0
  %2044 = vmatpush1.msra.mxu0 0.0
  %2045 = vmatprep.subr.mxu0 0.0
  %2046 = vmatpush1.msra.mxu0 0.0
  %2047 = vmatprep.subr.mxu0 0.0
  %2048 = vmatpush1.msra.mxu0 0.0
  %2049 = vmatprep.subr.mxu0 0.0
  %2050 = vmatpush1.msra.mxu0 0.0
  %2051 = vmatprep.subr.mxu0 0.0
  %2052 = vmatpush1.msra.mxu0 %v1861
  %2053 = vmatprep.subr.mxu0 0.0
  %2054 = vmatpush1.msra.mxu0 %v1860
  %2055 = vmatprep.subr.mxu0 0.0
  %2056 = vmatpush1.msra.mxu0 %v1859
  %2057 = vmatprep.subr.mxu0 0.0
  %2058 = vmatpush1.msra.mxu0 %v1858
  %2059 = vmatprep.subr.mxu0 0.0
  %2060 = vmatpush2.msra.mxu0 0.0
  %2061 = vmatprep.subr.mxu0 0.0
  %2062 = vmatpush2.msra.mxu0 0.0
  %2063 = vmatprep.subr.mxu0 0.0
  %2064 = vmatpush2.msra.mxu0 0.0
  %2065 = vmatprep.subr.mxu0 0.0
  %2066 = vmatpush2.msra.mxu0 0.0
  %2067 = vmatprep.subr.mxu0 0.0
  %2068 = vmatpush2.msra.mxu0 0.0
  %2069 = vmatprep.subr.mxu0 0.0
  %2070 = vmatpush2.msra.mxu0 0.0
  %2071 = vmatprep.subr.mxu0 0.0
  %2072 = vmatpush2.msra.mxu0 0.0
  %2073 = vmatprep.subr.mxu0 0.0
  %2074 = vmatpush2.msra.mxu0 0.0
  %2075 = vmatprep.subr.mxu0 0.0
  %2076 = vmatpush2.msra.mxu0 0.0
  %2077 = vmatprep.subr.mxu0 0.0
  %2078 = vmatpush2.msra.mxu0 0.0
  %2079 = vmatprep.subr.mxu0 0.0
  %2080 = vmatpush2.msra.mxu0 0.0
  %2081 = vmatprep.subr.mxu0 0.0
  %2082 = vmatpush2.msra.mxu0 0.0
  %2083 = vmatprep.subr.mxu0 0.0
  %2084 = vmatpush2.msra.mxu0 0.0
  %2085 = vmatprep.subr.mxu0 0.0
  %2086 = vmatpush2.msra.mxu0 0.0
  %2087 = vmatprep.subr.mxu0 0.0
  %2088 = vmatpush2.msra.mxu0 0.0
  %2089 = vmatprep.subr.mxu0 0.0
  %2090 = vmatpush2.msra.mxu0 0.0
  %2091 = vmatprep.mubr.f32.mxu0 0.0
  %2092 = vmatmul.mubr.f32.gmra.mxu0 %v2004
  %v2093 = vpop.f32.mrf.mxu0
  %v2094 = vadd.f32 %v1965, %v2093
  %v2095 = vpop.f32.mrf.mxu0
  %2096 = vmatprep.mubr.f32.mxu0 0.0
  %2097 = vmatmul.mubr.f32.gmra.mxu0 %v2007
  %v2098 = vpop.f32.mrf.mxu0
  %v2099 = vadd.f32 %v1970, %v2098
  %v2100 = vpop.f32.mrf.mxu0
  %2101 = vmatprep.mubr.f32.mxu0 0.0
  %2102 = vmatmul.mubr.f32.gmra.mxu0 %v2010
  %v2103 = vpop.f32.mrf.mxu0
  %v2104 = vadd.f32 %v1975, %v2103
  %v2105 = vpop.f32.mrf.mxu0
  %2106 = vmatprep.mubr.f32.mxu0 0.0
  %2107 = vmatmul.mubr.f32.gmra.mxu0 %v2013
  %v2108 = vpop.f32.mrf.mxu0
  %v2109 = vadd.f32 %v1980, %v2108
  %v2110 = vpop.f32.mrf.mxu0
  %2111 = vmatprep.mubr.f32.mxu0 0.0
  %2112 = vmatmul.mubr.f32.gmra.mxu0 %v2016
  %v2113 = vpop.f32.mrf.mxu0
  %v2114 = vadd.f32 %v1985, %v2113
  %v2115 = vpop.f32.mrf.mxu0
  %2116 = vmatprep.mubr.f32.mxu0 0.0
  %2117 = vmatmul.mubr.f32.gmra.mxu0 %v2019
  %v2118 = vpop.f32.mrf.mxu0
  %v2119 = vadd.f32 %v1990, %v2118
  %v2120 = vpop.f32.mrf.mxu0
  %2121 = vmatprep.mubr.f32.mxu0 0.0
  %2122 = vmatmul.mubr.f32.gmra.mxu0 %v2022
  %v2123 = vpop.f32.mrf.mxu0
  %v2124 = vadd.f32 %v1995, %v2123
  %v2125 = vpop.f32.mrf.mxu0
  %2126 = vmatprep.mubr.f32.mxu0 0.0
  %2127 = vmatmul.mubr.f32.gmra.mxu0 %v2025
  %v2128 = vpop.f32.mrf.mxu0
  %v2129 = vadd.f32 %v2000, %v2128
  %v2130 = vpop.f32.mrf.mxu0
  %2131 = vdwg.mxu0
  %v2132 = vld [vmem:[%s7] sm:$0x1]
  %v2134 = vlaneseq
  %v2135 = vshrl.u32 %v2134, 7
  %v2136 = vsub.s32 0, %v2135
  %v2137 = vrot.slane %v2132, %v2136
  %v2139 = vadd.f32 %v2094, %v2137
  %v2140 = vadd.f32 %v2099, %v2137
  %v2141 = vadd.f32 %v2104, %v2137
  %v2142 = vadd.f32 %v2109, %v2137
  %v2143 = vadd.f32 %v2114, %v2137
  %v2144 = vadd.f32 %v2119, %v2137
  %v2145 = vadd.f32 %v2124, %v2137
  %v2146 = vadd.f32 %v2129, %v2137
  %vm2147 = vcmask 31744
  %2148 = vst.msk [vmem:[%s8] sm:$0xff] %vm2147, %v2139
  %2149 = vst.msk [vmem:[%s8 + $0x8] sm:$0xff] %vm2147, %v2140
  %2150 = vst.msk [vmem:[%s8 + $0x10] sm:$0xff] %vm2147, %v2141
  %2151 = vst.msk [vmem:[%s8 + $0x18] sm:$0xff] %vm2147, %v2142
  %2152 = vst.msk [vmem:[%s8 + $0x20] sm:$0xff] %vm2147, %v2143
  %2153 = vst.msk [vmem:[%s8 + $0x28] sm:$0xff] %vm2147, %v2144
  %2154 = vst.msk [vmem:[%s8 + $0x30] sm:$0xff] %vm2147, %v2145
  %2155 = vst.msk [vmem:[%s8 + $0x38] sm:$0xff] %vm2147, %v2146
  // Predicated region
  $region34: #{tpu_custom_call.1} parent=0 // pred_check
    _
  $region35: #{tpu_custom_call.1} parent=0 // pred_check_branch
    %2157 = sbr.rel (0) target = $region37
  $region36: #{tpu_custom_call.1} parent=0 // pred_region
    _
  $region37: #{tpu_custom_call.1} parent=0 // pred_fallthru
    _
  // Predicated region
  $region38: #{tpu_custom_call.1} parent=0 // pred_check
    _
  $region39: #{tpu_custom_call.1} parent=0 // pred_check_branch
    %2159 = sbr.rel (0) target = $region41
  $region40: #{tpu_custom_call.1} parent=0 // pred_region
    _
  $region41: #{tpu_custom_call.1} parent=0 // pred_fallthru
    _

</llo_original>
